<compile_context>
chip_gen: v7x
topology: tpu7x:2x2x1
jax: 0.10.0
libtpu: 0.0.40
codegen_flags: <defaults>
</compile_context>

<pallas_src>
import warnings

import jax
import jax.numpy as jnp
from jax.experimental import pallas as pl
from jax.experimental.pallas import tpu as pltpu

# ---- model sizes (small, consistent with the module's forward) --------------
H = 32            # hidden_size
E = 32            # embedding_size
V = 64            # output_size (target vocab)
SRC_VOCAB = 50    # input_size (embedding rows)
NUM_LAYERS = 3
L = 8             # encoder sequence length
N = 2             # batch

G = 4 * H                                        # LSTM gate width (128)
_L0_ROWS = 2 * H + E + H                         # 128 (ctx | emb | h rows, layer 0)
_LSTM_ROWS = _L0_ROWS + (NUM_LAYERS - 1) * 2 * H  # 256 total slab rows


def _vmem():
    return pl.BlockSpec(memory_space=pltpu.MemorySpace.VMEM)


def _smem():
    return pl.BlockSpec(memory_space=pltpu.MemorySpace.SMEM)


def _sigmoid(v):
    # sigmoid(x) = 0.5 * (1 + tanh(x/2)): keeps the transcendental on the EUP
    # slot instead of a VALU divide.
    return 0.5 * (jnp.tanh(0.5 * v) + 1.0)


# ---------------- fused decoder-step kernel ----------------------------------
def decoder_step_kernel(tok_ref, embt_ref, enc_ref, hid_ref, cell_ref,
                        w1_ref, w2_ref, wlstm_ref, wfc_ref, bias_ref,
                        pred_ref, hout_ref, cout_ref):
    f32 = jnp.float32

    # ---- embedding lookup: 2-row dynamic gather; token ids live in SMEM.
    # Dropout on the embedding is identity at eval.
    emb = jnp.concatenate(
        [embt_ref[pl.ds(tok_ref[n], 1), :] for n in range(N)], axis=0)       # (N, E)

    # ---- attention energy MLP over all N*L encoder rows (batch-major) ----
    enc = enc_ref[...]                                                       # (N*L, 2H)
    h_last = hid_ref[NUM_LAYERS - 1]                                         # (N, H)
    # h_last @ W1h computed once, then sublane-broadcast across its L rows
    # (no selector matmul on the critical path).
    h_contrib = jnp.dot(h_last, w1_ref[0:H, :], preferred_element_type=f32)  # (N, H)
    hrep = jnp.broadcast_to(h_contrib[:, None, :], (N, L, H)).reshape(N * L, H)
    b1 = bias_ref[0:1, 0:H]
    z = jnp.maximum(
        hrep + jnp.dot(enc, w1_ref[H:3 * H, :], preferred_element_type=f32) + b1,
        0.0)                                                                 # (N*L, H)
    b2 = bias_ref[1:2, 0:1]
    e = jnp.maximum(
        jnp.dot(z, w2_ref[...], preferred_element_type=f32) + b2, 0.0)       # (N*L, 1)

    # ---- per-batch softmax over L + context, via sublane segment reductions ----
    e3 = e.reshape(N, L, 1)
    enc3 = enc.reshape(N, L, 2 * H)
    m = jnp.max(e3, axis=1, keepdims=True)        # per-batch stabilizer (robust)
    p = jnp.exp(e3 - m)                           # (N, L, 1)
    denom = jnp.sum(p, axis=1)                    # (N, 1)
    numer = jnp.sum(p * enc3, axis=1)             # (N, 2H)
    inv = pl.reciprocal(denom, approx=True)
    inv = inv * (2.0 - denom * inv)               # one Newton step: exact enough, stays off VALU divide
    ctx = numer * inv                             # (N, 2H)

    # ---- 3-layer LSTM step: split matmuls (no lane concats), weights from one slab ----
    def lstm_cell(g, c_prev):
        i = _sigmoid(g[:, 0 * H:1 * H])           # PyTorch gate order i, f, g, o
        f = _sigmoid(g[:, 1 * H:2 * H])
        gg = jnp.tanh(g[:, 2 * H:3 * H])
        o = _sigmoid(g[:, 3 * H:4 * H])
        c_new = f * c_prev + i * gg
        return o * jnp.tanh(c_new), c_new

    # layer 0: input = [ctx, emb]; three independent pushes pipeline through the MXU.
    g0 = (jnp.dot(ctx, wlstm_ref[0:2 * H, :], preferred_element_type=f32)
          + jnp.dot(emb, wlstm_ref[2 * H:2 * H + E, :], preferred_element_type=f32)
          + jnp.dot(hid_ref[0], wlstm_ref[2 * H + E:_L0_ROWS, :], preferred_element_type=f32)
          + bias_ref[2:3, :])
    h_new, c_new = lstm_cell(g0, cell_ref[0])
    hout_ref[0] = h_new
    cout_ref[0] = c_new

    row = _L0_ROWS
    for k in range(1, NUM_LAYERS):                # static unroll; inter-layer dropout == identity at eval
        gk = (jnp.dot(h_new, wlstm_ref[row:row + H, :], preferred_element_type=f32)
              + jnp.dot(hid_ref[k], wlstm_ref[row + H:row + 2 * H, :], preferred_element_type=f32)
              + bias_ref[2 + k:3 + k, :])
        row += 2 * H
        h_new, c_new = lstm_cell(gk, cell_ref[k])
        hout_ref[k] = h_new
        cout_ref[k] = c_new

    # ---- output projection (V = 64; the single-step masked store is negligible) ----
    pred_ref[...] = (jnp.dot(h_new, wfc_ref[...], preferred_element_type=f32)
                     + bias_ref[5:6, 0:V])


# ---------------- parameter init (deterministic, synthetic) ------------------
def init_params(key):
    ks = jax.random.split(key, 20)
    s = 0.1
    p = {}
    p["embedding"] = s * jax.random.normal(ks[0], (SRC_VOCAB, E), jnp.float32)
    # energy: Linear(3H, H) stored transposed; rows [0,H) act on h, [H,3H) on enc.
    p["w1"] = s * jax.random.normal(ks[1], (3 * H, H), jnp.float32)
    p["b1"] = s * jax.random.normal(ks[2], (1, H), jnp.float32)
    p["w2"] = s * jax.random.normal(ks[3], (H, 1), jnp.float32)
    p["b2"] = s * jax.random.normal(ks[4], (1, 1), jnp.float32)
    # LSTM: layer 0 input = 2H + E, layers 1.. input = H (independent b_ih / b_hh)
    wih, whh, bl = [], [], []
    kidx = 5
    for k in range(NUM_LAYERS):
        in_size = 2 * H + E if k == 0 else H
        wih.append(s * jax.random.normal(ks[kidx], (in_size, G), jnp.float32)); kidx += 1
        whh.append(s * jax.random.normal(ks[kidx], (H, G), jnp.float32)); kidx += 1
        b_ih = s * jax.random.normal(ks[kidx], (1, G), jnp.float32); kidx += 1
        b_hh = s * jax.random.normal(ks[kidx], (1, G), jnp.float32); kidx += 1
        bl.append(b_ih + b_hh)
    p["wih"], p["whh"], p["b_lstm_raw"] = wih, whh, bl
    p["wfc"] = s * jax.random.normal(ks[kidx], (H, V), jnp.float32); kidx += 1
    p["bfc"] = s * jax.random.normal(ks[kidx], (1, V), jnp.float32); kidx += 1

    # ---- packed kernel params: one LSTM weight slab, one bias slab ----
    p["w_lstm"] = jnp.concatenate(
        [jnp.concatenate([wih[k], whh[k]], axis=0) for k in range(NUM_LAYERS)], axis=0)
    assert p["w_lstm"].shape == (_LSTM_ROWS, G)
    bias = jnp.zeros((6, G), jnp.float32)
    bias = bias.at[0, :H].set(p["b1"][0])
    bias = bias.at[1, 0].set(p["b2"][0, 0])
    bias = bias.at[2:2 + NUM_LAYERS, :].set(jnp.concatenate(bl, axis=0))
    bias = bias.at[5, :V].set(p["bfc"][0])
    p["bias"] = bias
    return p


# ---------------- forward (matches Decoder.forward, eval mode) ---------------
def decoder_forward(params, x_tok, encoder_states, hidden, cell):
    tok = x_tok.astype(jnp.int32)                              # (N,) -> SMEM
    # Batch-major encoder layout: each batch element owns one contiguous group
    # of L (=8) sublane rows.  In a real decode loop this transpose is hoisted
    # (encoder_states is constant across steps).
    enc_bm = jnp.transpose(encoder_states, (1, 0, 2)).reshape(N * L, 2 * H)

    pred, new_h, new_c = pl.pallas_call(
        decoder_step_kernel,
        out_shape=(jax.ShapeDtypeStruct((N, V), jnp.float32),
                   jax.ShapeDtypeStruct((NUM_LAYERS, N, H), jnp.float32),
                   jax.ShapeDtypeStruct((NUM_LAYERS, N, H), jnp.float32)),
        in_specs=[_smem()] + [_vmem()] * 9,
        out_specs=(_vmem(), _vmem(), _vmem()),
        input_output_aliases={3: 1, 4: 2},                     # hidden/cell in place
    )(tok, params["embedding"], enc_bm, hidden, cell,
      params["w1"], params["w2"], params["w_lstm"], params["wfc"], params["bias"])
    return pred, new_h, new_c


# ---------------- pure-JAX reference (for correctness check) -----------------
def decoder_reference(params, x_tok, encoder_states, hidden, cell):
    emb = params["embedding"][x_tok]                           # (N, E)
    h_last = hidden[-1]
    hrep = jnp.broadcast_to(h_last[None], (L, N, H))
    cat = jnp.concatenate([hrep, encoder_states], axis=-1)     # (L, N, 3H)
    z = jnp.maximum(cat @ params["w1"] + params["b1"], 0.0)
    e = jnp.maximum(z @ params["w2"] + params["b2"], 0.0)      # (L, N, 1)
    attn = jax.nn.softmax(e, axis=0)
    ctx = jnp.sum(attn * encoder_states, axis=0)               # (N, 2H)
    layer_in = jnp.concatenate([ctx, emb], axis=-1)
    new_h, new_c = [], []
    for k in range(NUM_LAYERS):
        g = layer_in @ params["wih"][k] + hidden[k] @ params["whh"][k] \
            + params["b_lstm_raw"][k]
        i = jax.nn.sigmoid(g[:, :H]); f = jax.nn.sigmoid(g[:, H:2 * H])
        gg = jnp.tanh(g[:, 2 * H:3 * H]); o = jax.nn.sigmoid(g[:, 3 * H:])
        c_new = f * cell[k] + i * gg
        h_new = o * jnp.tanh(c_new)
        new_h.append(h_new); new_c.append(c_new)
        layer_in = h_new
    pred = layer_in @ params["wfc"] + params["bfc"]
    return pred, jnp.stack(new_h), jnp.stack(new_c)


if __name__ == "__main__":
    warnings.filterwarnings("ignore", message=".*[Dd]onat.*")

    key = jax.random.PRNGKey(0)
    k_p, k_x, k_e, k_h, k_c = jax.random.split(key, 5)

    params = init_params(k_p)
    x = jax.random.randint(k_x, (N,), 0, SRC_VOCAB, dtype=jnp.int32)
    encoder_states = jax.random.normal(k_e, (L, N, 2 * H), jnp.float32)
    hidden = jax.random.normal(k_h, (NUM_LAYERS, N, H), jnp.float32)
    cell = jax.random.normal(k_c, (NUM_LAYERS, N, H), jnp.float32)

    # Reference BEFORE the donated call (hidden/cell buffers are donated below).
    r_preds, r_h, r_c = decoder_reference(params, x, encoder_states, hidden, cell)
    jax.block_until_ready((r_preds, r_h, r_c))

    step = jax.jit(decoder_forward, donate_argnums=(3, 4))
    preds, new_h, new_c = step(params, x, encoder_states, hidden, cell)
    jax.block_until_ready((preds, new_h, new_c))

    assert preds.shape == (N, V)
    assert new_h.shape == (NUM_LAYERS, N, H) and new_c.shape == (NUM_LAYERS, N, H)
    assert jnp.allclose(preds, r_preds, rtol=1e-3, atol=1e-3)
    assert jnp.allclose(new_h, r_h, rtol=1e-3, atol=1e-3)
    assert jnp.allclose(new_c, r_c, rtol=1e-3, atol=1e-3)

    print("KERNEL_OK")
</pallas_src>

<mosaic_0001>
module attributes {stable_mosaic.version = 11 : i64} {
  func.func @decoder_step_kernel(%arg0: memref<2xi32, #tpu.memory_space<smem>>, %arg1: memref<50x32xf32, #tpu.memory_space<vmem>>, %arg2: memref<16x64xf32, #tpu.memory_space<vmem>>, %arg3: memref<3x2x32xf32, #tpu.memory_space<vmem>>, %arg4: memref<3x2x32xf32, #tpu.memory_space<vmem>>, %arg5: memref<96x32xf32, #tpu.memory_space<vmem>>, %arg6: memref<32x1xf32, #tpu.memory_space<vmem>>, %arg7: memref<256x128xf32, #tpu.memory_space<vmem>>, %arg8: memref<32x64xf32, #tpu.memory_space<vmem>>, %arg9: memref<6x128xf32, #tpu.memory_space<vmem>>, %arg10: memref<2x64xf32, #tpu.memory_space<vmem>>, %arg11: memref<3x2x32xf32, #tpu.memory_space<vmem>>, %arg12: memref<3x2x32xf32, #tpu.memory_space<vmem>>) attributes {dimension_semantics = [], scalar_prefetch = 0 : i64, scratch_operands = 0 : i64, tpu.core_type = #tpu.core_type<tc>} {
    %c0 = arith.constant 0 : index
    %0 = memref.load %arg0[%c0] : memref<2xi32, #tpu.memory_space<smem>>
    %1 = arith.index_cast %0 : i32 to index
    %c0_0 = arith.constant 0 : index
    %2 = vector.load %arg1[%1, %c0_0] : memref<50x32xf32, #tpu.memory_space<vmem>>, vector<1x32xf32>
    %c1 = arith.constant 1 : index
    %3 = memref.load %arg0[%c1] : memref<2xi32, #tpu.memory_space<smem>>
    %4 = arith.index_cast %3 : i32 to index
    %c0_1 = arith.constant 0 : index
    %5 = vector.load %arg1[%4, %c0_1] : memref<50x32xf32, #tpu.memory_space<vmem>>, vector<1x32xf32>
    %6 = tpu.concatenate %2, %5 in 0 : vector<1x32xf32>, vector<1x32xf32> -> vector<2x32xf32>
    %c0_2 = arith.constant 0 : index
    %c0_3 = arith.constant 0 : index
    %7 = vector.load %arg2[%c0_2, %c0_3] : memref<16x64xf32, #tpu.memory_space<vmem>>, vector<16x64xf32>
    %c2 = arith.constant 2 : index
    %c0_4 = arith.constant 0 : index
    %c0_5 = arith.constant 0 : index
    %8 = vector.load %arg3[%c2, %c0_4, %c0_5] : memref<3x2x32xf32, #tpu.memory_space<vmem>>, vector<1x2x32xf32>
    %9 = vector.shape_cast %8 : vector<1x2x32xf32> to vector<2x32xf32>
    %c0_6 = arith.constant 0 : index
    %c0_7 = arith.constant 0 : index
    %10 = vector.load %arg5[%c0_6, %c0_7] : memref<96x32xf32, #tpu.memory_space<vmem>>, vector<32x32xf32>
    %cst = arith.constant dense<0.000000e+00> : vector<2x32xf32>
    %11 = tpu.matmul %9, %10, %cst {dimension_numbers = #tpu.dot_dimension_numbers<[1], [0], [0], [1], [0, 0, 1, 1], [], []>} : vector<2x32xf32>, vector<32x32xf32>, vector<2x32xf32> -> vector<2x32xf32>
    %12 = vector.shape_cast %11 : vector<2x32xf32> to vector<2x1x32xf32>
    %13 = vector.shape_cast %12 : vector<2x1x32xf32> to vector<2x1x32xf32>
    %14 = vector.broadcast %13 : vector<2x1x32xf32> to vector<2x8x32xf32>
    %15 = vector.shape_cast %14 : vector<2x8x32xf32> to vector<16x32xf32>
    %c0_8 = arith.constant 0 : index
    %c0_9 = arith.constant 0 : index
    %16 = vector.load %arg9[%c0_8, %c0_9] : memref<6x128xf32, #tpu.memory_space<vmem>>, vector<1x32xf32>
    %c32 = arith.constant 32 : index
    %c0_10 = arith.constant 0 : index
    %17 = vector.load %arg5[%c32, %c0_10] : memref<96x32xf32, #tpu.memory_space<vmem>>, vector<64x32xf32>
    %cst_11 = arith.constant dense<0.000000e+00> : vector<16x32xf32>
    %18 = tpu.matmul %7, %17, %cst_11 {dimension_numbers = #tpu.dot_dimension_numbers<[1], [0], [0], [1], [0, 0, 1, 1], [], []>} : vector<16x64xf32>, vector<64x32xf32>, vector<16x32xf32> -> vector<16x32xf32>
    %19 = arith.addf %15, %18 : vector<16x32xf32>
    %20 = vector.broadcast %16 : vector<1x32xf32> to vector<16x32xf32>
    %21 = arith.addf %19, %20 : vector<16x32xf32>
    %cst_12 = arith.constant 0.000000e+00 : f32
    %22 = vector.broadcast %cst_12 : f32 to vector<16x32xf32>
    %23 = arith.maximumf %21, %22 : vector<16x32xf32>
    %c1_13 = arith.constant 1 : index
    %c0_14 = arith.constant 0 : index
    %24 = vector.load %arg9[%c1_13, %c0_14] : memref<6x128xf32, #tpu.memory_space<vmem>>, vector<1x1xf32>
    %c0_15 = arith.constant 0 : index
    %c0_16 = arith.constant 0 : index
    %25 = vector.load %arg6[%c0_15, %c0_16] : memref<32x1xf32, #tpu.memory_space<vmem>>, vector<32x1xf32>
    %cst_17 = arith.constant dense<0.000000e+00> : vector<16x1xf32>
    %26 = tpu.matmul %23, %25, %cst_17 {dimension_numbers = #tpu.dot_dimension_numbers<[1], [0], [0], [1], [0, 0, 1, 1], [], []>} : vector<16x32xf32>, vector<32x1xf32>, vector<16x1xf32> -> vector<16x1xf32>
    %27 = vector.broadcast %24 : vector<1x1xf32> to vector<16x1xf32>
    %28 = arith.addf %26, %27 : vector<16x1xf32>
    %cst_18 = arith.constant 0.000000e+00 : f32
    %29 = vector.broadcast %cst_18 : f32 to vector<16x1xf32>
    %30 = arith.maximumf %28, %29 : vector<16x1xf32>
    %31 = vector.shape_cast %30 : vector<16x1xf32> to vector<2x8x1xf32>
    %32 = vector.shape_cast %7 : vector<16x64xf32> to vector<2x8x64xf32>
    %cst_19 = arith.constant dense<0xFF800000> : vector<2x1xf32>
    %33 = vector.multi_reduction <maximumf>, %31, %cst_19 [1] : vector<2x8x1xf32> to vector<2x1xf32>
    %34 = vector.shape_cast %33 : vector<2x1xf32> to vector<2x1x1xf32>
    %35 = vector.broadcast %34 : vector<2x1x1xf32> to vector<2x8x1xf32>
    %36 = arith.subf %31, %35 : vector<2x8x1xf32>
    %37 = math.exp %36 : vector<2x8x1xf32>
    %cst_20 = arith.constant dense<0.000000e+00> : vector<2x1xf32>
    %38 = vector.multi_reduction <add>, %37, %cst_20 [1] : vector<2x8x1xf32> to vector<2x1xf32>
    %39 = vector.broadcast %37 : vector<2x8x1xf32> to vector<2x8x64xf32>
    %40 = arith.mulf %39, %32 : vector<2x8x64xf32>
    %cst_21 = arith.constant dense<0.000000e+00> : vector<2x64xf32>
    %41 = vector.multi_reduction <add>, %40, %cst_21 [1] : vector<2x8x64xf32> to vector<2x64xf32>
    %42 = tpu.reciprocal %38 {approx = true} : vector<2x1xf32> -> vector<2x1xf32>
    %43 = arith.mulf %38, %42 : vector<2x1xf32>
    %cst_22 = arith.constant 2.000000e+00 : f32
    %44 = vector.broadcast %cst_22 : f32 to vector<2x1xf32>
    %45 = arith.subf %44, %43 : vector<2x1xf32>
    %46 = arith.mulf %42, %45 : vector<2x1xf32>
    %47 = vector.broadcast %46 : vector<2x1xf32> to vector<2x64xf32>
    %48 = arith.mulf %41, %47 : vector<2x64xf32>
    %c0_23 = arith.constant 0 : index
    %c0_24 = arith.constant 0 : index
    %49 = vector.load %arg7[%c0_23, %c0_24] : memref<256x128xf32, #tpu.memory_space<vmem>>, vector<64x128xf32>
    %cst_25 = arith.constant dense<0.000000e+00> : vector<2x128xf32>
    %50 = tpu.matmul %48, %49, %cst_25 {dimension_numbers = #tpu.dot_dimension_numbers<[1], [0], [0], [1], [0, 0, 1, 1], [], []>} : vector<2x64xf32>, vector<64x128xf32>, vector<2x128xf32> -> vector<2x128xf32>
    %c64 = arith.constant 64 : index
    %c0_26 = arith.constant 0 : index
    %51 = vector.load %arg7[%c64, %c0_26] : memref<256x128xf32, #tpu.memory_space<vmem>>, vector<32x128xf32>
    %cst_27 = arith.constant dense<0.000000e+00> : vector<2x128xf32>
    %52 = tpu.matmul %6, %51, %cst_27 {dimension_numbers = #tpu.dot_dimension_numbers<[1], [0], [0], [1], [0, 0, 1, 1], [], []>} : vector<2x32xf32>, vector<32x128xf32>, vector<2x128xf32> -> vector<2x128xf32>
    %53 = arith.addf %50, %52 : vector<2x128xf32>
    %c0_28 = arith.constant 0 : index
    %c0_29 = arith.constant 0 : index
    %c0_30 = arith.constant 0 : index
    %54 = vector.load %arg3[%c0_28, %c0_29, %c0_30] : memref<3x2x32xf32, #tpu.memory_space<vmem>>, vector<1x2x32xf32>
    %55 = vector.shape_cast %54 : vector<1x2x32xf32> to vector<2x32xf32>
    %c96 = arith.constant 96 : index
    %c0_31 = arith.constant 0 : index
    %56 = vector.load %arg7[%c96, %c0_31] : memref<256x128xf32, #tpu.memory_space<vmem>>, vector<32x128xf32>
    %cst_32 = arith.constant dense<0.000000e+00> : vector<2x128xf32>
    %57 = tpu.matmul %55, %56, %cst_32 {dimension_numbers = #tpu.dot_dimension_numbers<[1], [0], [0], [1], [0, 0, 1, 1], [], []>} : vector<2x32xf32>, vector<32x128xf32>, vector<2x128xf32> -> vector<2x128xf32>
    %58 = arith.addf %53, %57 : vector<2x128xf32>
    %c2_33 = arith.constant 2 : index
    %c0_34 = arith.constant 0 : index
    %59 = vector.load %arg9[%c2_33, %c0_34] : memref<6x128xf32, #tpu.memory_space<vmem>>, vector<1x128xf32>
    %60 = vector.broadcast %59 : vector<1x128xf32> to vector<2x128xf32>
    %61 = arith.addf %58, %60 : vector<2x128xf32>
    %c0_35 = arith.constant 0 : index
    %c0_36 = arith.constant 0 : index
    %c0_37 = arith.constant 0 : index
    %62 = vector.load %arg4[%c0_35, %c0_36, %c0_37] : memref<3x2x32xf32, #tpu.memory_space<vmem>>, vector<1x2x32xf32>
    %63 = vector.shape_cast %62 : vector<1x2x32xf32> to vector<2x32xf32>
    %64 = vector.extract_strided_slice %61 {offsets = [0, 0], sizes = [2, 32], strides = [1, 1]} : vector<2x128xf32> to vector<2x32xf32>
    %cst_38 = arith.constant 5.000000e-01 : f32
    %65 = vector.broadcast %cst_38 : f32 to vector<2x32xf32>
    %66 = arith.mulf %65, %64 : vector<2x32xf32>
    %67 = math.tanh %66 : vector<2x32xf32>
    %cst_39 = arith.constant 1.000000e+00 : f32
    %68 = vector.broadcast %cst_39 : f32 to vector<2x32xf32>
    %69 = arith.addf %67, %68 : vector<2x32xf32>
    %cst_40 = arith.constant 5.000000e-01 : f32
    %70 = vector.broadcast %cst_40 : f32 to vector<2x32xf32>
    %71 = arith.mulf %70, %69 : vector<2x32xf32>
    %72 = vector.extract_strided_slice %61 {offsets = [0, 32], sizes = [2, 32], strides = [1, 1]} : vector<2x128xf32> to vector<2x32xf32>
    %cst_41 = arith.constant 5.000000e-01 : f32
    %73 = vector.broadcast %cst_41 : f32 to vector<2x32xf32>
    %74 = arith.mulf %73, %72 : vector<2x32xf32>
    %75 = math.tanh %74 : vector<2x32xf32>
    %cst_42 = arith.constant 1.000000e+00 : f32
    %76 = vector.broadcast %cst_42 : f32 to vector<2x32xf32>
    %77 = arith.addf %75, %76 : vector<2x32xf32>
    %cst_43 = arith.constant 5.000000e-01 : f32
    %78 = vector.broadcast %cst_43 : f32 to vector<2x32xf32>
    %79 = arith.mulf %78, %77 : vector<2x32xf32>
    %80 = vector.extract_strided_slice %61 {offsets = [0, 64], sizes = [2, 32], strides = [1, 1]} : vector<2x128xf32> to vector<2x32xf32>
    %81 = math.tanh %80 : vector<2x32xf32>
    %82 = vector.extract_strided_slice %61 {offsets = [0, 96], sizes = [2, 32], strides = [1, 1]} : vector<2x128xf32> to vector<2x32xf32>
    %cst_44 = arith.constant 5.000000e-01 : f32
    %83 = vector.broadcast %cst_44 : f32 to vector<2x32xf32>
    %84 = arith.mulf %83, %82 : vector<2x32xf32>
    %85 = math.tanh %84 : vector<2x32xf32>
    %cst_45 = arith.constant 1.000000e+00 : f32
    %86 = vector.broadcast %cst_45 : f32 to vector<2x32xf32>
    %87 = arith.addf %85, %86 : vector<2x32xf32>
    %cst_46 = arith.constant 5.000000e-01 : f32
    %88 = vector.broadcast %cst_46 : f32 to vector<2x32xf32>
    %89 = arith.mulf %88, %87 : vector<2x32xf32>
    %90 = arith.mulf %79, %63 : vector<2x32xf32>
    %91 = arith.mulf %71, %81 : vector<2x32xf32>
    %92 = arith.addf %90, %91 : vector<2x32xf32>
    %93 = math.tanh %92 : vector<2x32xf32>
    %94 = arith.mulf %89, %93 : vector<2x32xf32>
    %c0_47 = arith.constant 0 : index
    %c0_48 = arith.constant 0 : index
    %c0_49 = arith.constant 0 : index
    %95 = vector.load %arg11[%c0_47, %c0_48, %c0_49] : memref<3x2x32xf32, #tpu.memory_space<vmem>>, vector<1x2x32xf32>
    %96 = vector.shape_cast %95 : vector<1x2x32xf32> to vector<2x32xf32>
    %97 = vector.shape_cast %94 : vector<2x32xf32> to vector<1x2x32xf32>
    tpu.vector_store %arg11[%c0_47, %c0_48, %c0_49], %97 {strides = array<i32>} : memref<3x2x32xf32, #tpu.memory_space<vmem>>, vector<1x2x32xf32>,
    %c0_50 = arith.constant 0 : index
    %c0_51 = arith.constant 0 : index
    %c0_52 = arith.constant 0 : index
    %98 = vector.load %arg12[%c0_50, %c0_51, %c0_52] : memref<3x2x32xf32, #tpu.memory_space<vmem>>, vector<1x2x32xf32>
    %99 = vector.shape_cast %98 : vector<1x2x32xf32> to vector<2x32xf32>
    %100 = vector.shape_cast %92 : vector<2x32xf32> to vector<1x2x32xf32>
    tpu.vector_store %arg12[%c0_50, %c0_51, %c0_52], %100 {strides = array<i32>} : memref<3x2x32xf32, #tpu.memory_space<vmem>>, vector<1x2x32xf32>,
    %c128 = arith.constant 128 : index
    %c0_53 = arith.constant 0 : index
    %101 = vector.load %arg7[%c128, %c0_53] : memref<256x128xf32, #tpu.memory_space<vmem>>, vector<32x128xf32>
    %cst_54 = arith.constant dense<0.000000e+00> : vector<2x128xf32>
    %102 = tpu.matmul %94, %101, %cst_54 {dimension_numbers = #tpu.dot_dimension_numbers<[1], [0], [0], [1], [0, 0, 1, 1], [], []>} : vector<2x32xf32>, vector<32x128xf32>, vector<2x128xf32> -> vector<2x128xf32>
    %c1_55 = arith.constant 1 : index
    %c0_56 = arith.constant 0 : index
    %c0_57 = arith.constant 0 : index
    %103 = vector.load %arg3[%c1_55, %c0_56, %c0_57] : memref<3x2x32xf32, #tpu.memory_space<vmem>>, vector<1x2x32xf32>
    %104 = vector.shape_cast %103 : vector<1x2x32xf32> to vector<2x32xf32>
    %c160 = arith.constant 160 : index
    %c0_58 = arith.constant 0 : index
    %105 = vector.load %arg7[%c160, %c0_58] : memref<256x128xf32, #tpu.memory_space<vmem>>, vector<32x128xf32>
    %cst_59 = arith.constant dense<0.000000e+00> : vector<2x128xf32>
    %106 = tpu.matmul %104, %105, %cst_59 {dimension_numbers = #tpu.dot_dimension_numbers<[1], [0], [0], [1], [0, 0, 1, 1], [], []>} : vector<2x32xf32>, vector<32x128xf32>, vector<2x128xf32> -> vector<2x128xf32>
    %107 = arith.addf %102, %106 : vector<2x128xf32>
    %c3 = arith.constant 3 : index
    %c0_60 = arith.constant 0 : index
    %108 = vector.load %arg9[%c3, %c0_60] : memref<6x128xf32, #tpu.memory_space<vmem>>, vector<1x128xf32>
    %109 = vector.broadcast %108 : vector<1x128xf32> to vector<2x128xf32>
    %110 = arith.addf %107, %109 : vector<2x128xf32>
    %c1_61 = arith.constant 1 : index
    %c0_62 = arith.constant 0 : index
    %c0_63 = arith.constant 0 : index
    %111 = vector.load %arg4[%c1_61, %c0_62, %c0_63] : memref<3x2x32xf32, #tpu.memory_space<vmem>>, vector<1x2x32xf32>
    %112 = vector.shape_cast %111 : vector<1x2x32xf32> to vector<2x32xf32>
    %113 = vector.extract_strided_slice %110 {offsets = [0, 0], sizes = [2, 32], strides = [1, 1]} : vector<2x128xf32> to vector<2x32xf32>
    %cst_64 = arith.constant 5.000000e-01 : f32
    %114 = vector.broadcast %cst_64 : f32 to vector<2x32xf32>
    %115 = arith.mulf %114, %113 : vector<2x32xf32>
    %116 = math.tanh %115 : vector<2x32xf32>
    %cst_65 = arith.constant 1.000000e+00 : f32
    %117 = vector.broadcast %cst_65 : f32 to vector<2x32xf32>
    %118 = arith.addf %116, %117 : vector<2x32xf32>
    %cst_66 = arith.constant 5.000000e-01 : f32
    %119 = vector.broadcast %cst_66 : f32 to vector<2x32xf32>
    %120 = arith.mulf %119, %118 : vector<2x32xf32>
    %121 = vector.extract_strided_slice %110 {offsets = [0, 32], sizes = [2, 32], strides = [1, 1]} : vector<2x128xf32> to vector<2x32xf32>
    %cst_67 = arith.constant 5.000000e-01 : f32
    %122 = vector.broadcast %cst_67 : f32 to vector<2x32xf32>
    %123 = arith.mulf %122, %121 : vector<2x32xf32>
    %124 = math.tanh %123 : vector<2x32xf32>
    %cst_68 = arith.constant 1.000000e+00 : f32
    %125 = vector.broadcast %cst_68 : f32 to vector<2x32xf32>
    %126 = arith.addf %124, %125 : vector<2x32xf32>
    %cst_69 = arith.constant 5.000000e-01 : f32
    %127 = vector.broadcast %cst_69 : f32 to vector<2x32xf32>
    %128 = arith.mulf %127, %126 : vector<2x32xf32>
    %129 = vector.extract_strided_slice %110 {offsets = [0, 64], sizes = [2, 32], strides = [1, 1]} : vector<2x128xf32> to vector<2x32xf32>
    %130 = math.tanh %129 : vector<2x32xf32>
    %131 = vector.extract_strided_slice %110 {offsets = [0, 96], sizes = [2, 32], strides = [1, 1]} : vector<2x128xf32> to vector<2x32xf32>
    %cst_70 = arith.constant 5.000000e-01 : f32
    %132 = vector.broadcast %cst_70 : f32 to vector<2x32xf32>
    %133 = arith.mulf %132, %131 : vector<2x32xf32>
    %134 = math.tanh %133 : vector<2x32xf32>
    %cst_71 = arith.constant 1.000000e+00 : f32
    %135 = vector.broadcast %cst_71 : f32 to vector<2x32xf32>
    %136 = arith.addf %134, %135 : vector<2x32xf32>
    %cst_72 = arith.constant 5.000000e-01 : f32
    %137 = vector.broadcast %cst_72 : f32 to vector<2x32xf32>
    %138 = arith.mulf %137, %136 : vector<2x32xf32>
    %139 = arith.mulf %128, %112 : vector<2x32xf32>
    %140 = arith.mulf %120, %130 : vector<2x32xf32>
    %141 = arith.addf %139, %140 : vector<2x32xf32>
    %142 = math.tanh %141 : vector<2x32xf32>
    %143 = arith.mulf %138, %142 : vector<2x32xf32>
    %c1_73 = arith.constant 1 : index
    %c0_74 = arith.constant 0 : index
    %c0_75 = arith.constant 0 : index
    %144 = vector.load %arg11[%c1_73, %c0_74, %c0_75] : memref<3x2x32xf32, #tpu.memory_space<vmem>>, vector<1x2x32xf32>
    %145 = vector.shape_cast %144 : vector<1x2x32xf32> to vector<2x32xf32>
    %146 = vector.shape_cast %143 : vector<2x32xf32> to vector<1x2x32xf32>
    tpu.vector_store %arg11[%c1_73, %c0_74, %c0_75], %146 {strides = array<i32>} : memref<3x2x32xf32, #tpu.memory_space<vmem>>, vector<1x2x32xf32>,
    %c1_76 = arith.constant 1 : index
    %c0_77 = arith.constant 0 : index
    %c0_78 = arith.constant 0 : index
    %147 = vector.load %arg12[%c1_76, %c0_77, %c0_78] : memref<3x2x32xf32, #tpu.memory_space<vmem>>, vector<1x2x32xf32>
    %148 = vector.shape_cast %147 : vector<1x2x32xf32> to vector<2x32xf32>
    %149 = vector.shape_cast %141 : vector<2x32xf32> to vector<1x2x32xf32>
    tpu.vector_store %arg12[%c1_76, %c0_77, %c0_78], %149 {strides = array<i32>} : memref<3x2x32xf32, #tpu.memory_space<vmem>>, vector<1x2x32xf32>,
    %c192 = arith.constant 192 : index
    %c0_79 = arith.constant 0 : index
    %150 = vector.load %arg7[%c192, %c0_79] : memref<256x128xf32, #tpu.memory_space<vmem>>, vector<32x128xf32>
    %cst_80 = arith.constant dense<0.000000e+00> : vector<2x128xf32>
    %151 = tpu.matmul %143, %150, %cst_80 {dimension_numbers = #tpu.dot_dimension_numbers<[1], [0], [0], [1], [0, 0, 1, 1], [], []>} : vector<2x32xf32>, vector<32x128xf32>, vector<2x128xf32> -> vector<2x128xf32>
    %c2_81 = arith.constant 2 : index
    %c0_82 = arith.constant 0 : index
    %c0_83 = arith.constant 0 : index
    %152 = vector.load %arg3[%c2_81, %c0_82, %c0_83] : memref<3x2x32xf32, #tpu.memory_space<vmem>>, vector<1x2x32xf32>
    %153 = vector.shape_cast %152 : vector<1x2x32xf32> to vector<2x32xf32>
    %c224 = arith.constant 224 : index
    %c0_84 = arith.constant 0 : index
    %154 = vector.load %arg7[%c224, %c0_84] : memref<256x128xf32, #tpu.memory_space<vmem>>, vector<32x128xf32>
    %cst_85 = arith.constant dense<0.000000e+00> : vector<2x128xf32>
    %155 = tpu.matmul %153, %154, %cst_85 {dimension_numbers = #tpu.dot_dimension_numbers<[1], [0], [0], [1], [0, 0, 1, 1], [], []>} : vector<2x32xf32>, vector<32x128xf32>, vector<2x128xf32> -> vector<2x128xf32>
    %156 = arith.addf %151, %155 : vector<2x128xf32>
    %c4 = arith.constant 4 : index
    %c0_86 = arith.constant 0 : index
    %157 = vector.load %arg9[%c4, %c0_86] : memref<6x128xf32, #tpu.memory_space<vmem>>, vector<1x128xf32>
    %158 = vector.broadcast %157 : vector<1x128xf32> to vector<2x128xf32>
    %159 = arith.addf %156, %158 : vector<2x128xf32>
    %c2_87 = arith.constant 2 : index
    %c0_88 = arith.constant 0 : index
    %c0_89 = arith.constant 0 : index
    %160 = vector.load %arg4[%c2_87, %c0_88, %c0_89] : memref<3x2x32xf32, #tpu.memory_space<vmem>>, vector<1x2x32xf32>
    %161 = vector.shape_cast %160 : vector<1x2x32xf32> to vector<2x32xf32>
    %162 = vector.extract_strided_slice %159 {offsets = [0, 0], sizes = [2, 32], strides = [1, 1]} : vector<2x128xf32> to vector<2x32xf32>
    %cst_90 = arith.constant 5.000000e-01 : f32
    %163 = vector.broadcast %cst_90 : f32 to vector<2x32xf32>
    %164 = arith.mulf %163, %162 : vector<2x32xf32>
    %165 = math.tanh %164 : vector<2x32xf32>
    %cst_91 = arith.constant 1.000000e+00 : f32
    %166 = vector.broadcast %cst_91 : f32 to vector<2x32xf32>
    %167 = arith.addf %165, %166 : vector<2x32xf32>
    %cst_92 = arith.constant 5.000000e-01 : f32
    %168 = vector.broadcast %cst_92 : f32 to vector<2x32xf32>
    %169 = arith.mulf %168, %167 : vector<2x32xf32>
    %170 = vector.extract_strided_slice %159 {offsets = [0, 32], sizes = [2, 32], strides = [1, 1]} : vector<2x128xf32> to vector<2x32xf32>
    %cst_93 = arith.constant 5.000000e-01 : f32
    %171 = vector.broadcast %cst_93 : f32 to vector<2x32xf32>
    %172 = arith.mulf %171, %170 : vector<2x32xf32>
    %173 = math.tanh %172 : vector<2x32xf32>
    %cst_94 = arith.constant 1.000000e+00 : f32
    %174 = vector.broadcast %cst_94 : f32 to vector<2x32xf32>
    %175 = arith.addf %173, %174 : vector<2x32xf32>
    %cst_95 = arith.constant 5.000000e-01 : f32
    %176 = vector.broadcast %cst_95 : f32 to vector<2x32xf32>
    %177 = arith.mulf %176, %175 : vector<2x32xf32>
    %178 = vector.extract_strided_slice %159 {offsets = [0, 64], sizes = [2, 32], strides = [1, 1]} : vector<2x128xf32> to vector<2x32xf32>
    %179 = math.tanh %178 : vector<2x32xf32>
    %180 = vector.extract_strided_slice %159 {offsets = [0, 96], sizes = [2, 32], strides = [1, 1]} : vector<2x128xf32> to vector<2x32xf32>
    %cst_96 = arith.constant 5.000000e-01 : f32
    %181 = vector.broadcast %cst_96 : f32 to vector<2x32xf32>
    %182 = arith.mulf %181, %180 : vector<2x32xf32>
    %183 = math.tanh %182 : vector<2x32xf32>
    %cst_97 = arith.constant 1.000000e+00 : f32
    %184 = vector.broadcast %cst_97 : f32 to vector<2x32xf32>
    %185 = arith.addf %183, %184 : vector<2x32xf32>
    %cst_98 = arith.constant 5.000000e-01 : f32
    %186 = vector.broadcast %cst_98 : f32 to vector<2x32xf32>
    %187 = arith.mulf %186, %185 : vector<2x32xf32>
    %188 = arith.mulf %177, %161 : vector<2x32xf32>
    %189 = arith.mulf %169, %179 : vector<2x32xf32>
    %190 = arith.addf %188, %189 : vector<2x32xf32>
    %191 = math.tanh %190 : vector<2x32xf32>
    %192 = arith.mulf %187, %191 : vector<2x32xf32>
    %c2_99 = arith.constant 2 : index
    %c0_100 = arith.constant 0 : index
    %c0_101 = arith.constant 0 : index
    %193 = vector.load %arg11[%c2_99, %c0_100, %c0_101] : memref<3x2x32xf32, #tpu.memory_space<vmem>>, vector<1x2x32xf32>
    %194 = vector.shape_cast %193 : vector<1x2x32xf32> to vector<2x32xf32>
    %195 = vector.shape_cast %192 : vector<2x32xf32> to vector<1x2x32xf32>
    tpu.vector_store %arg11[%c2_99, %c0_100, %c0_101], %195 {strides = array<i32>} : memref<3x2x32xf32, #tpu.memory_space<vmem>>, vector<1x2x32xf32>,
    %c2_102 = arith.constant 2 : index
    %c0_103 = arith.constant 0 : index
    %c0_104 = arith.constant 0 : index
    %196 = vector.load %arg12[%c2_102, %c0_103, %c0_104] : memref<3x2x32xf32, #tpu.memory_space<vmem>>, vector<1x2x32xf32>
    %197 = vector.shape_cast %196 : vector<1x2x32xf32> to vector<2x32xf32>
    %198 = vector.shape_cast %190 : vector<2x32xf32> to vector<1x2x32xf32>
    tpu.vector_store %arg12[%c2_102, %c0_103, %c0_104], %198 {strides = array<i32>} : memref<3x2x32xf32, #tpu.memory_space<vmem>>, vector<1x2x32xf32>,
    %c0_105 = arith.constant 0 : index
    %c0_106 = arith.constant 0 : index
    %199 = vector.load %arg8[%c0_105, %c0_106] : memref<32x64xf32, #tpu.memory_space<vmem>>, vector<32x64xf32>
    %cst_107 = arith.constant dense<0.000000e+00> : vector<2x64xf32>
    %200 = tpu.matmul %192, %199, %cst_107 {dimension_numbers = #tpu.dot_dimension_numbers<[1], [0], [0], [1], [0, 0, 1, 1], [], []>} : vector<2x32xf32>, vector<32x64xf32>, vector<2x64xf32> -> vector<2x64xf32>
    %c5 = arith.constant 5 : index
    %c0_108 = arith.constant 0 : index
    %201 = vector.load %arg9[%c5, %c0_108] : memref<6x128xf32, #tpu.memory_space<vmem>>, vector<1x64xf32>
    %202 = vector.broadcast %201 : vector<1x64xf32> to vector<2x64xf32>
    %203 = arith.addf %200, %202 : vector<2x64xf32>
    %c0_109 = arith.constant 0 : index
    %c0_110 = arith.constant 0 : index
    %204 = vector.load %arg10[%c0_109, %c0_110] : memref<2x64xf32, #tpu.memory_space<vmem>>, vector<2x64xf32>
    tpu.vector_store %arg10[%c0_109, %c0_110], %203 {strides = array<i32>} : memref<2x64xf32, #tpu.memory_space<vmem>>, vector<2x64xf32>,
    return
  }
}

</mosaic_0001>

<llo_original>
// kernel: decoder_forward.1
$region0: #{decoder_forward.1}
  #allocation0 [shape = 'u32[]', space=smem, size = 0x4, offset = 0x4, fixed_abs, tag = 'smem constant byte address 0x4 - core index']
  #allocation1 [shape = 'u32[144,128]{1,0:T(1,128)}', space=vmem, size = 0x12000, scoped, tag = 'internal scratch']
  %s0 = inlined_call_operand.vmem [shape: s32[2], index: 0, kind: input, shape index: {}]
  %s1 = inlined_call_operand.vmem [shape: f32[50,32], index: 1, kind: input, shape index: {}]
  %s2 = inlined_call_operand.vmem [shape: f32[16,64], index: 2, kind: input, shape index: {}]
  %s3 = inlined_call_operand.hbm [shape: f32[3,2,32], index: 3, kind: input, shape index: {}, may-alias: {3,11}]
  %s4 = inlined_call_operand.hbm [shape: f32[3,2,32], index: 4, kind: input, shape index: {}, may-alias: {4,12}]
  %s5 = inlined_call_operand.vmem [shape: f32[96,32], index: 5, kind: input, shape index: {}]
  %s6 = inlined_call_operand.vmem [shape: f32[32,1], index: 6, kind: input, shape index: {}]
  %s7 = inlined_call_operand.vmem [shape: f32[256,128], index: 7, kind: input, shape index: {}]
  %s8 = inlined_call_operand.vmem [shape: f32[32,64], index: 8, kind: input, shape index: {}]
  %s9 = inlined_call_operand.hbm [shape: f32[6,128], index: 9, kind: input, shape index: {}]
  %s10 = inlined_call_operand.hbm [shape: f32[2,64], index: 10, kind: output, shape index: {0}]
  %s11 = inlined_call_operand.hbm [shape: f32[3,2,32], index: 11, kind: output, shape index: {1}, may-alias: {3,11}]
  %s12 = inlined_call_operand.hbm [shape: f32[3,2,32], index: 12, kind: output, shape index: {2}, may-alias: {4,12}]
  %13 = xla_tuple %s10, %s11, %s12
  %s14 = sld [smem:[#allocation0]]
  $region82: #{decoder_forward.1} parent=0
    _
  %s16 = ssub.s32 1, %s14
  %s17 = scalar_select 0, %s16, %s14
  $region1: #{decoder_forward.1} parent=0
    #allocation2 [shape = 'u8[512]{0}', space=smem, size = 0x200, scoped, tag = 'input window, operand 0, single buffered']
    #allocation3 [shape = 's32[1]{0}', space=sflag, size = 0x4, scoped, tag = 'scoped memory for decoder_forward.1']
    #allocation4 [shape = 's32[1]{0}', space=sflag, size = 0x4, scoped, tag = 'scoped memory for decoder_forward.1']
    #allocation5 [shape = 's32[1]{0}', space=sflag, size = 0x4, scoped, tag = 'scoped memory for decoder_forward.1']
    #allocation6 [shape = 'u8[3072]{0}', space=vmem, size = 0xc00, scoped, tag = 'input window, operand 3, single buffered']
    #allocation7 [shape = 'u8[3072]{0}', space=vmem, size = 0xc00, scoped, tag = 'input window, operand 4, single buffered']
    #allocation8 [shape = 's32[1]{0}', space=sflag, size = 0x4, scoped, tag = 'scoped memory for decoder_forward.1']
    #allocation9 [shape = 'u8[4096]{0}', space=vmem, size = 0x1000, scoped, tag = 'input window, operand 9, single buffered']
    #allocation10 [shape = 'u8[1024]{0}', space=vmem, size = 0x400, scoped, tag = 'output window, operand 0, single buffered']
    #allocation11 [shape = 'u8[3072]{0}', space=vmem, size = 0xc00, scoped, tag = 'output window, operand 1, single buffered']
    #allocation12 [shape = 's32[1]{0}', space=sflag, size = 0x4, scoped, tag = 'scoped memory for decoder_forward.1']
    #allocation13 [shape = 'u8[3072]{0}', space=vmem, size = 0xc00, scoped, tag = 'output window, operand 2, single buffered']
    %18 = vsyncpa [#allocation5], 0
    %19 = vsyncpa [#allocation3], 0
    %20 = vsyncpa [#allocation8], 0
    %21 = vsyncpa [#allocation4], 0
    %22 = vsyncpa [#allocation12], 0
    // Predicated region
    $region2: #{decoder_forward.1} parent=1 // pred_check
      _
    $region3: #{decoder_forward.1} parent=1 // pred_check_branch
      %24 = sbr.rel (0) target = $region5
    $region4: #{decoder_forward.1} parent=1 // pred_region
      %s26 = ssub.s32 16, 16
      %27 = vsyncadd [#allocation5], %s26
      %s29 = sshll.u32 %s0, 4
      %s30 = int_to_ptr.vmem [resolvable:$true] %s29
      %32 = dma.vmem_to_smem %s30, 16, [#allocation2], [#allocation5]
    $region5: #{decoder_forward.1} parent=1 // pred_fallthru
      _
    // Predicated region
    $region6: #{decoder_forward.1} parent=1 // pred_check
      _
    $region7: #{decoder_forward.1} parent=1 // pred_check_branch
      %34 = sbr.rel (0) target = $region9
    $region8: #{decoder_forward.1} parent=1 // pred_region
      _
    $region9: #{decoder_forward.1} parent=1 // pred_fallthru
      _
    // Predicated region
    $region10: #{decoder_forward.1} parent=1 // pred_check
      _
    $region11: #{decoder_forward.1} parent=1 // pred_check_branch
      %36 = sbr.rel (0) target = $region13
    $region12: #{decoder_forward.1} parent=1 // pred_region
      _
    $region13: #{decoder_forward.1} parent=1 // pred_fallthru
      _
    // Predicated region
    $region14: #{decoder_forward.1} parent=1 // pred_check
      _
    $region15: #{decoder_forward.1} parent=1 // pred_check_branch
      %38 = sbr.rel (0) target = $region17
    $region16: #{decoder_forward.1} parent=1 // pred_region
      %s40 = ssub.s32 96, 96
      %41 = vsyncadd [#allocation3], %s40
      %s42 = sshll.u32 [#allocation6], 4
      %s43 = int_to_ptr.vmem [resolvable:$true] %s42
      %48 = dma.hbm_to_vmem [thread:$0]  %s3, 96, %s43, [#allocation3], 32, 32, 2
    $region17: #{decoder_forward.1} parent=1 // pred_fallthru
      _
    // Predicated region
    $region18: #{decoder_forward.1} parent=1 // pred_check
      _
    $region19: #{decoder_forward.1} parent=1 // pred_check_branch
      %50 = sbr.rel (0) target = $region21
    $region20: #{decoder_forward.1} parent=1 // pred_region
      %s52 = ssub.s32 96, 96
      %53 = vsyncadd [#allocation8], %s52
      %s54 = sshll.u32 [#allocation7], 4
      %s55 = int_to_ptr.vmem [resolvable:$true] %s54
      %60 = dma.hbm_to_vmem [thread:$0]  %s4, 96, %s55, [#allocation8], 32, 32, 2
    $region21: #{decoder_forward.1} parent=1 // pred_fallthru
      _
    // Predicated region
    $region22: #{decoder_forward.1} parent=1 // pred_check
      _
    $region23: #{decoder_forward.1} parent=1 // pred_check_branch
      %62 = sbr.rel (0) target = $region25
    $region24: #{decoder_forward.1} parent=1 // pred_region
      _
    $region25: #{decoder_forward.1} parent=1 // pred_fallthru
      _
    // Predicated region
    $region26: #{decoder_forward.1} parent=1 // pred_check
      _
    $region27: #{decoder_forward.1} parent=1 // pred_check_branch
      %64 = sbr.rel (0) target = $region29
    $region28: #{decoder_forward.1} parent=1 // pred_region
      _
    $region29: #{decoder_forward.1} parent=1 // pred_fallthru
      _
    // Predicated region
    $region30: #{decoder_forward.1} parent=1 // pred_check
      _
    $region31: #{decoder_forward.1} parent=1 // pred_check_branch
      %66 = sbr.rel (0) target = $region33
    $region32: #{decoder_forward.1} parent=1 // pred_region
      _
    $region33: #{decoder_forward.1} parent=1 // pred_fallthru
      _
    // Predicated region
    $region34: #{decoder_forward.1} parent=1 // pred_check
      _
    $region35: #{decoder_forward.1} parent=1 // pred_check_branch
      %68 = sbr.rel (0) target = $region37
    $region36: #{decoder_forward.1} parent=1 // pred_region
      _
    $region37: #{decoder_forward.1} parent=1 // pred_fallthru
      _
    // Predicated region
    $region38: #{decoder_forward.1} parent=1 // pred_check
      _
    $region39: #{decoder_forward.1} parent=1 // pred_check_branch
      %70 = sbr.rel (0) target = $region41
    $region40: #{decoder_forward.1} parent=1 // pred_region
      %s72 = ssub.s32 128, 128
      %73 = vsyncadd [#allocation8], %s72
      %s75 = sshll.u32 [#allocation9], 4
      %s76 = int_to_ptr.vmem [resolvable:$true] %s75
      %78 = dma.hbm_to_vmem [thread:$0]  %s9, 128, %s76, [#allocation8]
    $region41: #{decoder_forward.1} parent=1 // pred_fallthru
      _
    // Predicated region
    $region42: #{decoder_forward.1} parent=1 // pred_check
      _
    $region43: #{decoder_forward.1} parent=1 // pred_check_branch
      %80 = sbr.rel (0) target = $region45
    $region44: #{decoder_forward.1} parent=1 // pred_region
      %81 = dma.done [#allocation5], 16
    $region45: #{decoder_forward.1} parent=1 // pred_fallthru
      _
    // Predicated region
    $region46: #{decoder_forward.1} parent=1 // pred_check
      _
    $region47: #{decoder_forward.1} parent=1 // pred_check_branch
      %83 = sbr.rel (0) target = $region49
    $region48: #{decoder_forward.1} parent=1 // pred_region
      %84 = dma.done [#allocation3], 96
    $region49: #{decoder_forward.1} parent=1 // pred_fallthru
      _
    // Predicated region
    $region50: #{decoder_forward.1} parent=1 // pred_check
      _
    $region51: #{decoder_forward.1} parent=1 // pred_check_branch
      %86 = sbr.rel (0) target = $region53
    $region52: #{decoder_forward.1} parent=1 // pred_region
      %87 = dma.done [#allocation8], 96
    $region53: #{decoder_forward.1} parent=1 // pred_fallthru
      _
    // Predicated region
    $region54: #{decoder_forward.1} parent=1 // pred_check
      _
    $region55: #{decoder_forward.1} parent=1 // pred_check_branch
      %89 = sbr.rel (0) target = $region57
    $region56: #{decoder_forward.1} parent=1 // pred_region
      %90 = dma.done [#allocation8], 128
    $region57: #{decoder_forward.1} parent=1 // pred_fallthru
      _
    %91 = sfence
    %s92 = sld [smem:[#allocation2]]
    %s93 = scalar_lea.vmem %s1, %s92
    %v94 = vld [vmem:[%s93] sm:$0x1]
    %s95 = sld [smem:[#allocation2 + $0x1]]
    %s96 = scalar_lea.vmem %s1, %s95
    %v97 = vld [vmem:[%s96] sm:$0x1]
    %v99 = vrot.slane %v97, 7
    %vm101 = vcmask 1040384
    %v102 = vsel %vm101, %v94, %v99
    %v103 = vld [vmem:[%s2] sm:$0xff]
    %v104 = vld [vmem:[%s2 + $0x8] sm:$0xff]
    %s105 = scalar_lea.vmem [#allocation6], 4
    %v106 = vld [vmem:[%s105] sm:$0x3]
    %v107 = vld [vmem:[%s5] sm:$0xff]
    %v108 = vld [vmem:[%s5 + $0x8] sm:$0xff]
    %v109 = vld [vmem:[%s5 + $0x10] sm:$0xff]
    %v110 = vld [vmem:[%s5 + $0x18] sm:$0xff]
    %vm111 = vcmask 261120
    %v113 = vsel %vm111, %v106, 0
    %115 = vmatprep.subr.mxu0 0.0
    %116 = vmatpush1.msra.mxu0 %v107
    %117 = vmatprep.subr.mxu0 0.0
    %118 = vmatpush1.msra.mxu0 %v108
    %119 = vmatprep.subr.mxu0 0.0
    %120 = vmatpush1.msra.mxu0 %v109
    %121 = vmatprep.subr.mxu0 0.0
    %122 = vmatpush1.msra.mxu0 %v110
    %123 = vmatprep.subr.mxu0 0.0
    %124 = vmatpush1.msra.mxu0 0.0
    %125 = vmatprep.subr.mxu0 0.0
    %126 = vmatpush1.msra.mxu0 0.0
    %127 = vmatprep.subr.mxu0 0.0
    %128 = vmatpush1.msra.mxu0 0.0
    %129 = vmatprep.subr.mxu0 0.0
    %130 = vmatpush1.msra.mxu0 0.0
    %131 = vmatprep.subr.mxu0 0.0
    %132 = vmatpush1.msra.mxu0 0.0
    %133 = vmatprep.subr.mxu0 0.0
    %134 = vmatpush1.msra.mxu0 0.0
    %135 = vmatprep.subr.mxu0 0.0
    %136 = vmatpush1.msra.mxu0 0.0
    %137 = vmatprep.subr.mxu0 0.0
    %138 = vmatpush1.msra.mxu0 0.0
    %139 = vmatprep.subr.mxu0 0.0
    %140 = vmatpush1.msra.mxu0 0.0
    %141 = vmatprep.subr.mxu0 0.0
    %142 = vmatpush1.msra.mxu0 0.0
    %143 = vmatprep.subr.mxu0 0.0
    %144 = vmatpush1.msra.mxu0 0.0
    %145 = vmatprep.subr.mxu0 0.0
    %146 = vmatpush1.msra.mxu0 0.0
    %147 = vmatprep.subr.mxu0 0.0
    %148 = vmatpush1.msra.mxu0 0.0
    %149 = vmatprep.subr.mxu0 0.0
    %150 = vmatpush1.msra.mxu0 0.0
    %151 = vmatprep.subr.mxu0 0.0
    %152 = vmatpush1.msra.mxu0 0.0
    %153 = vmatprep.subr.mxu0 0.0
    %154 = vmatpush1.msra.mxu0 0.0
    %155 = vmatprep.subr.mxu0 0.0
    %156 = vmatpush1.msra.mxu0 0.0
    %157 = vmatprep.subr.mxu0 0.0
    %158 = vmatpush1.msra.mxu0 0.0
    %159 = vmatprep.subr.mxu0 0.0
    %160 = vmatpush1.msra.mxu0 0.0
    %161 = vmatprep.subr.mxu0 0.0
    %162 = vmatpush1.msra.mxu0 0.0
    %163 = vmatprep.subr.mxu0 0.0
    %164 = vmatpush1.msra.mxu0 0.0
    %165 = vmatprep.subr.mxu0 0.0
    %166 = vmatpush1.msra.mxu0 0.0
    %167 = vmatprep.subr.mxu0 0.0
    %168 = vmatpush1.msra.mxu0 0.0
    %169 = vmatprep.subr.mxu0 0.0
    %170 = vmatpush1.msra.mxu0 0.0
    %171 = vmatprep.subr.mxu0 0.0
    %172 = vmatpush1.msra.mxu0 0.0
    %173 = vmatprep.subr.mxu0 0.0
    %174 = vmatpush1.msra.mxu0 0.0
    %175 = vmatprep.subr.mxu0 0.0
    %176 = vmatpush1.msra.mxu0 0.0
    %177 = vmatprep.subr.mxu0 0.0
    %178 = vmatpush1.msra.mxu0 0.0
    %179 = vmatprep.mubr.f32.mxu0 0.0
    %180 = vmatmul.mubr.f32.gmra.mrb[0].mxu0 %v113
    %v181 = vpop.f32.mrb[0].mxu0
    %v182 = vadd.f32 0.0, %v181
    %v183 = vpop.f32.mrb[0].mxu0
    %184 = vdwg.mxu0
    %v187 = vunpack.c.l.s4 1966171168
    %v188 = vunpack.c.0.s8 %v187
    %v189 = vlaneseq
    %v190 = vshrl.u32 %v189, 7
    %v191 = vsub.s32 %v188, %v190
    %v192 = vrot.slane %v182, %v191
    %v193 = vcombine.high %v192, %v192
    %v195 = vunpack.c.l.s4 1966171168
    %v196 = vunpack.c.0.s8 %v195
    %v197 = vlaneseq
    %v198 = vshrl.u32 %v197, 7
    %v199 = vsub.s32 %v196, %v198
    %v200 = vrot.slane %v192, %v199
    %v202 = vunpack.c.l.s4 1966171168
    %v203 = vunpack.c.0.s8 %v202
    %v204 = vlaneseq
    %v205 = vshrl.u32 %v204, 7
    %v206 = vsub.s32 %v203, %v205
    %v207 = vrot.slane %v193, %v206
    %v208 = vlaneseq
    %v209 = vshrl.u32 %v208, 7
    %v210 = vsub.s32 0, %v209
    %v211 = vrot.slane %v200, %v210
    %v212 = vlaneseq
    %v213 = vshrl.u32 %v212, 7
    %v214 = vsub.s32 0, %v213
    %v215 = vrot.slane %v207, %v214
    %v218 = vld [vmem:[#allocation9] sm:$0x1]
    %v219 = vld [vmem:[%s5 + $0x20] sm:$0xff]
    %v220 = vld [vmem:[%s5 + $0x28] sm:$0xff]
    %v221 = vld [vmem:[%s5 + $0x30] sm:$0xff]
    %v222 = vld [vmem:[%s5 + $0x38] sm:$0xff]
    %v223 = vld [vmem:[%s5 + $0x40] sm:$0xff]
    %v224 = vld [vmem:[%s5 + $0x48] sm:$0xff]
    %v225 = vld [vmem:[%s5 + $0x50] sm:$0xff]
    %v226 = vld [vmem:[%s5 + $0x58] sm:$0xff]
    %vm227 = vcmask 523264
    %v229 = vsel %vm227, %v103, 0
    %v232 = vsel %vm227, %v104, 0
    %234 = vmatprep.subr.mxu0 0.0
    %235 = vmatpush1.msra.mxu0 %v219
    %236 = vmatprep.subr.mxu0 0.0
    %237 = vmatpush1.msra.mxu0 %v220
    %238 = vmatprep.subr.mxu0 0.0
    %239 = vmatpush1.msra.mxu0 %v221
    %240 = vmatprep.subr.mxu0 0.0
    %241 = vmatpush1.msra.mxu0 %v222
    %242 = vmatprep.subr.mxu0 0.0
    %243 = vmatpush1.msra.mxu0 %v223
    %244 = vmatprep.subr.mxu0 0.0
    %245 = vmatpush1.msra.mxu0 %v224
    %246 = vmatprep.subr.mxu0 0.0
    %247 = vmatpush1.msra.mxu0 %v225
    %248 = vmatprep.subr.mxu0 0.0
    %249 = vmatpush1.msra.mxu0 %v226
    %250 = vmatprep.subr.mxu0 0.0
    %251 = vmatpush1.msra.mxu0 0.0
    %252 = vmatprep.subr.mxu0 0.0
    %253 = vmatpush1.msra.mxu0 0.0
    %254 = vmatprep.subr.mxu0 0.0
    %255 = vmatpush1.msra.mxu0 0.0
    %256 = vmatprep.subr.mxu0 0.0
    %257 = vmatpush1.msra.mxu0 0.0
    %258 = vmatprep.subr.mxu0 0.0
    %259 = vmatpush1.msra.mxu0 0.0
    %260 = vmatprep.subr.mxu0 0.0
    %261 = vmatpush1.msra.mxu0 0.0
    %262 = vmatprep.subr.mxu0 0.0
    %263 = vmatpush1.msra.mxu0 0.0
    %264 = vmatprep.subr.mxu0 0.0
    %265 = vmatpush1.msra.mxu0 0.0
    %266 = vmatprep.subr.mxu0 0.0
    %267 = vmatpush1.msra.mxu0 0.0
    %268 = vmatprep.subr.mxu0 0.0
    %269 = vmatpush1.msra.mxu0 0.0
    %270 = vmatprep.subr.mxu0 0.0
    %271 = vmatpush1.msra.mxu0 0.0
    %272 = vmatprep.subr.mxu0 0.0
    %273 = vmatpush1.msra.mxu0 0.0
    %274 = vmatprep.subr.mxu0 0.0
    %275 = vmatpush1.msra.mxu0 0.0
    %276 = vmatprep.subr.mxu0 0.0
    %277 = vmatpush1.msra.mxu0 0.0
    %278 = vmatprep.subr.mxu0 0.0
    %279 = vmatpush1.msra.mxu0 0.0
    %280 = vmatprep.subr.mxu0 0.0
    %281 = vmatpush1.msra.mxu0 0.0
    %282 = vmatprep.subr.mxu0 0.0
    %283 = vmatpush1.msra.mxu0 0.0
    %284 = vmatprep.subr.mxu0 0.0
    %285 = vmatpush1.msra.mxu0 0.0
    %286 = vmatprep.subr.mxu0 0.0
    %287 = vmatpush1.msra.mxu0 0.0
    %288 = vmatprep.subr.mxu0 0.0
    %289 = vmatpush1.msra.mxu0 0.0
    %290 = vmatprep.subr.mxu0 0.0
    %291 = vmatpush1.msra.mxu0 0.0
    %292 = vmatprep.subr.mxu0 0.0
    %293 = vmatpush1.msra.mxu0 0.0
    %294 = vmatprep.subr.mxu0 0.0
    %295 = vmatpush1.msra.mxu0 0.0
    %296 = vmatprep.subr.mxu0 0.0
    %297 = vmatpush1.msra.mxu0 0.0
    %298 = vmatprep.mubr.f32.mxu0 0.0
    %299 = vmatmul.mubr.f32.gmra.mrb[0].mxu0 %v229
    %v300 = vpop.f32.mrb[0].mxu0
    %v301 = vadd.f32 0.0, %v300
    %v302 = vpop.f32.mrb[0].mxu0
    %303 = vmatprep.mubr.f32.mxu0 0.0
    %304 = vmatmul.mubr.f32.gmra.mrb[0].mxu0 %v232
    %v305 = vpop.f32.mrb[0].mxu0
    %v306 = vadd.f32 0.0, %v305
    %v307 = vpop.f32.mrb[0].mxu0
    %308 = vdwg.mxu0
    %v309 = vadd.f32 %v211, %v301
    %v310 = vadd.f32 %v215, %v306
    %v311 = vlaneseq
    %v312 = vshrl.u32 %v311, 7
    %v313 = vsub.s32 0, %v312
    %v314 = vrot.slane %v218, %v313
    %v315 = vadd.f32 %v309, %v314
    %v316 = vadd.f32 %v310, %v314
    %v317 = vmax.f32 %v315, 0.0
    %v318 = vmax.f32 %v316, 0.0
    %v319 = vld [vmem:[#allocation9 + $0x1] sm:$0x1]
    %v320 = vld [vmem:[%s6] sm:$0xff]
    %v321 = vld [vmem:[%s6 + $0x8] sm:$0xff]
    %v322 = vld [vmem:[%s6 + $0x10] sm:$0xff]
    %v323 = vld [vmem:[%s6 + $0x18] sm:$0xff]
    %v324 = vlaneseq
    %v325 = vshrl.u32 %v324, 7
    %v326 = vsub.s32 0, %v325
    %v327 = vrot.slane %v319, %v326
    %v329 = vsel %vm111, %v317, 0
    %v332 = vsel %vm111, %v318, 0
    %334 = vmatprep.subr.mxu0 0.0
    %335 = vmatpush1.msra.mxu0 %v320
    %336 = vmatprep.subr.mxu0 0.0
    %337 = vmatpush1.msra.mxu0 %v321
    %338 = vmatprep.subr.mxu0 0.0
    %339 = vmatpush1.msra.mxu0 %v322
    %340 = vmatprep.subr.mxu0 0.0
    %341 = vmatpush1.msra.mxu0 %v323
    %342 = vmatprep.subr.mxu0 0.0
    %343 = vmatpush1.msra.mxu0 0.0
    %344 = vmatprep.subr.mxu0 0.0
    %345 = vmatpush1.msra.mxu0 0.0
    %346 = vmatprep.subr.mxu0 0.0
    %347 = vmatpush1.msra.mxu0 0.0
    %348 = vmatprep.subr.mxu0 0.0
    %349 = vmatpush1.msra.mxu0 0.0
    %350 = vmatprep.subr.mxu0 0.0
    %351 = vmatpush1.msra.mxu0 0.0
    %352 = vmatprep.subr.mxu0 0.0
    %353 = vmatpush1.msra.mxu0 0.0
    %354 = vmatprep.subr.mxu0 0.0
    %355 = vmatpush1.msra.mxu0 0.0
    %356 = vmatprep.subr.mxu0 0.0
    %357 = vmatpush1.msra.mxu0 0.0
    %358 = vmatprep.subr.mxu0 0.0
    %359 = vmatpush1.msra.mxu0 0.0
    %360 = vmatprep.subr.mxu0 0.0
    %361 = vmatpush1.msra.mxu0 0.0
    %362 = vmatprep.subr.mxu0 0.0
    %363 = vmatpush1.msra.mxu0 0.0
    %364 = vmatprep.subr.mxu0 0.0
    %365 = vmatpush1.msra.mxu0 0.0
    %366 = vmatprep.subr.mxu0 0.0
    %367 = vmatpush1.msra.mxu0 0.0
    %368 = vmatprep.subr.mxu0 0.0
    %369 = vmatpush1.msra.mxu0 0.0
    %370 = vmatprep.subr.mxu0 0.0
    %371 = vmatpush1.msra.mxu0 0.0
    %372 = vmatprep.subr.mxu0 0.0
    %373 = vmatpush1.msra.mxu0 0.0
    %374 = vmatprep.subr.mxu0 0.0
    %375 = vmatpush1.msra.mxu0 0.0
    %376 = vmatprep.subr.mxu0 0.0
    %377 = vmatpush1.msra.mxu0 0.0
    %378 = vmatprep.subr.mxu0 0.0
    %379 = vmatpush1.msra.mxu0 0.0
    %380 = vmatprep.subr.mxu0 0.0
    %381 = vmatpush1.msra.mxu0 0.0
    %382 = vmatprep.subr.mxu0 0.0
    %383 = vmatpush1.msra.mxu0 0.0
    %384 = vmatprep.subr.mxu0 0.0
    %385 = vmatpush1.msra.mxu0 0.0
    %386 = vmatprep.subr.mxu0 0.0
    %387 = vmatpush1.msra.mxu0 0.0
    %388 = vmatprep.subr.mxu0 0.0
    %389 = vmatpush1.msra.mxu0 0.0
    %390 = vmatprep.subr.mxu0 0.0
    %391 = vmatpush1.msra.mxu0 0.0
    %392 = vmatprep.subr.mxu0 0.0
    %393 = vmatpush1.msra.mxu0 0.0
    %394 = vmatprep.subr.mxu0 0.0
    %395 = vmatpush1.msra.mxu0 0.0
    %396 = vmatprep.subr.mxu0 0.0
    %397 = vmatpush1.msra.mxu0 0.0
    %398 = vmatprep.mubr.f32.mxu0 0.0
    %399 = vmatmul.mubr.f32.gmra.mrb[0].mxu0 %v329
    %v400 = vpop.f32.mrb[0].mxu0
    %v401 = vadd.f32 %v327, %v400
    %v402 = vpop.f32.mrb[0].mxu0
    %403 = vmatprep.mubr.f32.mxu0 0.0
    %404 = vmatmul.mubr.f32.gmra.mrb[0].mxu0 %v332
    %v405 = vpop.f32.mrb[0].mxu0
    %v406 = vadd.f32 %v327, %v405
    %v407 = vpop.f32.mrb[0].mxu0
    %408 = vdwg.mxu0
    %v409 = vmax.f32 %v401, 0.0
    %v410 = vmax.f32 %v406, 0.0
    %vm411 = vcmask 7168
    %v412 = vsel %vm411, %v409, -inf
    %v413 = vrot.slane %v412, 4
    %v414 = vmax.f32 %v412, %v413
    %v415 = vrot.slane %v414, 2
    %v416 = vmax.f32 %v414, %v415
    %v417 = vrot.slane %v416, 1
    %v418 = vmax.f32 %v416, %v417
    %v419 = vsel %vm411, %v410, -inf
    %v420 = vrot.slane %v419, 4
    %v421 = vmax.f32 %v419, %v420
    %v422 = vrot.slane %v421, 2
    %v423 = vmax.f32 %v421, %v422
    %v424 = vrot.slane %v423, 1
    %v425 = vmax.f32 %v423, %v424
    %v426 = vsub.f32 %v409, %v418
    %v427 = vsub.f32 %v410, %v425
    %v428 = vmul.f32 %v426, 1.442695
    %v429 = vpow.pop %v428
    %v430 = vmul.f32 %v427, 1.442695
    %v431 = vpow.pop %v430
    %v432 = vsel %vm411, %v429, 0.0
    %v433 = vrot.slane %v432, 4
    %v434 = vadd.f32 %v432, %v433
    %v435 = vrot.slane %v434, 2
    %v436 = vadd.f32 %v434, %v435
    %v437 = vrot.slane %v436, 1
    %v438 = vadd.f32 %v436, %v437
    %v439 = vsel %vm411, %v431, 0.0
    %v440 = vrot.slane %v439, 4
    %v441 = vadd.f32 %v439, %v440
    %v442 = vrot.slane %v441, 2
    %v443 = vadd.f32 %v441, %v442
    %v444 = vrot.slane %v443, 1
    %v445 = vadd.f32 %v443, %v444
    %447 = vset.pattern.permute.xlu0 0
    %448 = vperm.xlu0 %447, %v429
    %v449 = vpop.permute.xlu0 %448
    %452 = vset.pattern.permute.xlu0 0
    %453 = vperm.xlu0 %452, %v431
    %v454 = vpop.permute.xlu0 %453
    %v456 = vmul.f32 %v449, %v103
    %v457 = vmul.f32 %v454, %v104
    %v458 = vsel %vm227, %v456, 0.0
    %v459 = vrot.slane %v458, 4
    %v460 = vadd.f32 %v458, %v459
    %v461 = vrot.slane %v460, 2
    %v462 = vadd.f32 %v460, %v461
    %v463 = vrot.slane %v462, 1
    %v464 = vadd.f32 %v462, %v463
    %v465 = vsel %vm227, %v457, 0.0
    %v466 = vrot.slane %v465, 4
    %v467 = vadd.f32 %v465, %v466
    %v468 = vrot.slane %v467, 2
    %v469 = vadd.f32 %v467, %v468
    %v470 = vrot.slane %v469, 1
    %v471 = vadd.f32 %v469, %v470
    %v472 = vrcp.pop %v438
    %v473 = vrcp.pop %v445
    %v474 = vmul.f32 %v438, %v472
    %v475 = vmul.f32 %v445, %v473
    %v476 = vsub.f32 2.0, %v474
    %v477 = vsub.f32 2.0, %v475
    %v478 = vmul.f32 %v472, %v476
    %v479 = vmul.f32 %v473, %v477
    %481 = vset.pattern.permute.xlu0 0
    %482 = vperm.xlu0 %481, %v478
    %v483 = vpop.permute.xlu0 %482
    %486 = vset.pattern.permute.xlu0 0
    %487 = vperm.xlu0 %486, %v479
    %v488 = vpop.permute.xlu0 %487
    %v490 = vmul.f32 %v464, %v483
    %v491 = vmul.f32 %v471, %v488
    %v492 = vld [vmem:[%s7] sm:$0xff]
    %v493 = vld [vmem:[%s7 + $0x8] sm:$0xff]
    %v494 = vld [vmem:[%s7 + $0x10] sm:$0xff]
    %v495 = vld [vmem:[%s7 + $0x18] sm:$0xff]
    %v496 = vld [vmem:[%s7 + $0x20] sm:$0xff]
    %v497 = vld [vmem:[%s7 + $0x28] sm:$0xff]
    %v498 = vld [vmem:[%s7 + $0x30] sm:$0xff]
    %v499 = vld [vmem:[%s7 + $0x38] sm:$0xff]
    %v500 = vld [vmem:[%s7 + $0x40] sm:$0xff]
    %v501 = vld [vmem:[%s7 + $0x48] sm:$0xff]
    %v502 = vld [vmem:[%s7 + $0x50] sm:$0xff]
    %v503 = vld [vmem:[%s7 + $0x58] sm:$0xff]
    %v505 = vsel %vm111, %v102, 0
    %507 = vmatprep.subr.mxu0 0.0
    %508 = vmatpush1.msra.mxu0 %v500
    %509 = vmatprep.subr.mxu0 0.0
    %510 = vmatpush1.msra.mxu0 %v501
    %511 = vmatprep.subr.mxu0 0.0
    %512 = vmatpush1.msra.mxu0 %v502
    %513 = vmatprep.subr.mxu0 0.0
    %514 = vmatpush1.msra.mxu0 %v503
    %515 = vmatprep.subr.mxu0 0.0
    %516 = vmatpush1.msra.mxu0 0.0
    %517 = vmatprep.subr.mxu0 0.0
    %518 = vmatpush1.msra.mxu0 0.0
    %519 = vmatprep.subr.mxu0 0.0
    %520 = vmatpush1.msra.mxu0 0.0
    %521 = vmatprep.subr.mxu0 0.0
    %522 = vmatpush1.msra.mxu0 0.0
    %523 = vmatprep.subr.mxu0 0.0
    %524 = vmatpush1.msra.mxu0 0.0
    %525 = vmatprep.subr.mxu0 0.0
    %526 = vmatpush1.msra.mxu0 0.0
    %527 = vmatprep.subr.mxu0 0.0
    %528 = vmatpush1.msra.mxu0 0.0
    %529 = vmatprep.subr.mxu0 0.0
    %530 = vmatpush1.msra.mxu0 0.0
    %531 = vmatprep.subr.mxu0 0.0
    %532 = vmatpush1.msra.mxu0 0.0
    %533 = vmatprep.subr.mxu0 0.0
    %534 = vmatpush1.msra.mxu0 0.0
    %535 = vmatprep.subr.mxu0 0.0
    %536 = vmatpush1.msra.mxu0 0.0
    %537 = vmatprep.subr.mxu0 0.0
    %538 = vmatpush1.msra.mxu0 0.0
    %539 = vmatprep.subr.mxu0 0.0
    %540 = vmatpush1.msra.mxu0 0.0
    %541 = vmatprep.subr.mxu0 0.0
    %542 = vmatpush1.msra.mxu0 0.0
    %543 = vmatprep.subr.mxu0 0.0
    %544 = vmatpush1.msra.mxu0 0.0
    %545 = vmatprep.subr.mxu0 0.0
    %546 = vmatpush1.msra.mxu0 0.0
    %547 = vmatprep.subr.mxu0 0.0
    %548 = vmatpush1.msra.mxu0 0.0
    %549 = vmatprep.subr.mxu0 0.0
    %550 = vmatpush1.msra.mxu0 0.0
    %551 = vmatprep.subr.mxu0 0.0
    %552 = vmatpush1.msra.mxu0 0.0
    %553 = vmatprep.subr.mxu0 0.0
    %554 = vmatpush1.msra.mxu0 0.0
    %555 = vmatprep.subr.mxu0 0.0
    %556 = vmatpush1.msra.mxu0 0.0
    %557 = vmatprep.subr.mxu0 0.0
    %558 = vmatpush1.msra.mxu0 0.0
    %559 = vmatprep.subr.mxu0 0.0
    %560 = vmatpush1.msra.mxu0 0.0
    %561 = vmatprep.subr.mxu0 0.0
    %562 = vmatpush1.msra.mxu0 0.0
    %563 = vmatprep.subr.mxu0 0.0
    %564 = vmatpush1.msra.mxu0 0.0
    %565 = vmatprep.subr.mxu0 0.0
    %566 = vmatpush1.msra.mxu0 0.0
    %567 = vmatprep.subr.mxu0 0.0
    %568 = vmatpush1.msra.mxu0 0.0
    %569 = vmatprep.subr.mxu0 0.0
    %570 = vmatpush1.msra.mxu0 0.0
    %571 = vmatprep.mubr.f32.mxu0 0.0
    %572 = vmatmul.mubr.f32.gmra.mrb[0].mxu0 %v505
    %v573 = vpop.f32.mrb[0].mxu0
    %v574 = vadd.f32 0.0, %v573
    %v575 = vpop.f32.mrb[0].mxu0
    %576 = vdwg.mxu0
    %vm579 = vcmask 1041409
    %v580 = vsel %vm579, %v491, %v490
    %v581 = vsel %vm227, %v580, 0
    %583 = vmatprep.subr.mxu0 0.0
    %584 = vmatpush1.msra.mxu0 %v492
    %585 = vmatprep.subr.mxu0 0.0
    %586 = vmatpush1.msra.mxu0 %v493
    %587 = vmatprep.subr.mxu0 0.0
    %588 = vmatpush1.msra.mxu0 %v494
    %589 = vmatprep.subr.mxu0 0.0
    %590 = vmatpush1.msra.mxu0 %v495
    %591 = vmatprep.subr.mxu0 0.0
    %592 = vmatpush1.msra.mxu0 %v496
    %593 = vmatprep.subr.mxu0 0.0
    %594 = vmatpush1.msra.mxu0 %v497
    %595 = vmatprep.subr.mxu0 0.0
    %596 = vmatpush1.msra.mxu0 %v498
    %597 = vmatprep.subr.mxu0 0.0
    %598 = vmatpush1.msra.mxu0 %v499
    %599 = vmatprep.subr.mxu0 0.0
    %600 = vmatpush1.msra.mxu0 0.0
    %601 = vmatprep.subr.mxu0 0.0
    %602 = vmatpush1.msra.mxu0 0.0
    %603 = vmatprep.subr.mxu0 0.0
    %604 = vmatpush1.msra.mxu0 0.0
    %605 = vmatprep.subr.mxu0 0.0
    %606 = vmatpush1.msra.mxu0 0.0
    %607 = vmatprep.subr.mxu0 0.0
    %608 = vmatpush1.msra.mxu0 0.0
    %609 = vmatprep.subr.mxu0 0.0
    %610 = vmatpush1.msra.mxu0 0.0
    %611 = vmatprep.subr.mxu0 0.0
    %612 = vmatpush1.msra.mxu0 0.0
    %613 = vmatprep.subr.mxu0 0.0
    %614 = vmatpush1.msra.mxu0 0.0
    %615 = vmatprep.subr.mxu0 0.0
    %616 = vmatpush1.msra.mxu0 0.0
    %617 = vmatprep.subr.mxu0 0.0
    %618 = vmatpush1.msra.mxu0 0.0
    %619 = vmatprep.subr.mxu0 0.0
    %620 = vmatpush1.msra.mxu0 0.0
    %621 = vmatprep.subr.mxu0 0.0
    %622 = vmatpush1.msra.mxu0 0.0
    %623 = vmatprep.subr.mxu0 0.0
    %624 = vmatpush1.msra.mxu0 0.0
    %625 = vmatprep.subr.mxu0 0.0
    %626 = vmatpush1.msra.mxu0 0.0
    %627 = vmatprep.subr.mxu0 0.0
    %628 = vmatpush1.msra.mxu0 0.0
    %629 = vmatprep.subr.mxu0 0.0
    %630 = vmatpush1.msra.mxu0 0.0
    %631 = vmatprep.subr.mxu0 0.0
    %632 = vmatpush1.msra.mxu0 0.0
    %633 = vmatprep.subr.mxu0 0.0
    %634 = vmatpush1.msra.mxu0 0.0
    %635 = vmatprep.subr.mxu0 0.0
    %636 = vmatpush1.msra.mxu0 0.0
    %637 = vmatprep.subr.mxu0 0.0
    %638 = vmatpush1.msra.mxu0 0.0
    %639 = vmatprep.subr.mxu0 0.0
    %640 = vmatpush1.msra.mxu0 0.0
    %641 = vmatprep.subr.mxu0 0.0
    %642 = vmatpush1.msra.mxu0 0.0
    %643 = vmatprep.subr.mxu0 0.0
    %644 = vmatpush1.msra.mxu0 0.0
    %645 = vmatprep.subr.mxu0 0.0
    %646 = vmatpush1.msra.mxu0 0.0
    %647 = vmatprep.mubr.f32.mxu0 0.0
    %648 = vmatmul.mubr.f32.gmra.mrb[0].mxu0 %v581
    %v649 = vpop.f32.mrb[0].mxu0
    %v650 = vadd.f32 %v574, %v649
    %v651 = vpop.f32.mrb[0].mxu0
    %652 = vdwg.mxu0
    %v653 = vld [vmem:[#allocation6] sm:$0x3]
    %v654 = vld [vmem:[%s7 + $0x60] sm:$0xff]
    %v655 = vld [vmem:[%s7 + $0x68] sm:$0xff]
    %v656 = vld [vmem:[%s7 + $0x70] sm:$0xff]
    %v657 = vld [vmem:[%s7 + $0x78] sm:$0xff]
    %v659 = vsel %vm111, %v653, 0
    %661 = vmatprep.subr.mxu0 0.0
    %662 = vmatpush1.msra.mxu0 %v654
    %663 = vmatprep.subr.mxu0 0.0
    %664 = vmatpush1.msra.mxu0 %v655
    %665 = vmatprep.subr.mxu0 0.0
    %666 = vmatpush1.msra.mxu0 %v656
    %667 = vmatprep.subr.mxu0 0.0
    %668 = vmatpush1.msra.mxu0 %v657
    %669 = vmatprep.subr.mxu0 0.0
    %670 = vmatpush1.msra.mxu0 0.0
    %671 = vmatprep.subr.mxu0 0.0
    %672 = vmatpush1.msra.mxu0 0.0
    %673 = vmatprep.subr.mxu0 0.0
    %674 = vmatpush1.msra.mxu0 0.0
    %675 = vmatprep.subr.mxu0 0.0
    %676 = vmatpush1.msra.mxu0 0.0
    %677 = vmatprep.subr.mxu0 0.0
    %678 = vmatpush1.msra.mxu0 0.0
    %679 = vmatprep.subr.mxu0 0.0
    %680 = vmatpush1.msra.mxu0 0.0
    %681 = vmatprep.subr.mxu0 0.0
    %682 = vmatpush1.msra.mxu0 0.0
    %683 = vmatprep.subr.mxu0 0.0
    %684 = vmatpush1.msra.mxu0 0.0
    %685 = vmatprep.subr.mxu0 0.0
    %686 = vmatpush1.msra.mxu0 0.0
    %687 = vmatprep.subr.mxu0 0.0
    %688 = vmatpush1.msra.mxu0 0.0
    %689 = vmatprep.subr.mxu0 0.0
    %690 = vmatpush1.msra.mxu0 0.0
    %691 = vmatprep.subr.mxu0 0.0
    %692 = vmatpush1.msra.mxu0 0.0
    %693 = vmatprep.subr.mxu0 0.0
    %694 = vmatpush1.msra.mxu0 0.0
    %695 = vmatprep.subr.mxu0 0.0
    %696 = vmatpush1.msra.mxu0 0.0
    %697 = vmatprep.subr.mxu0 0.0
    %698 = vmatpush1.msra.mxu0 0.0
    %699 = vmatprep.subr.mxu0 0.0
    %700 = vmatpush1.msra.mxu0 0.0
    %701 = vmatprep.subr.mxu0 0.0
    %702 = vmatpush1.msra.mxu0 0.0
    %703 = vmatprep.subr.mxu0 0.0
    %704 = vmatpush1.msra.mxu0 0.0
    %705 = vmatprep.subr.mxu0 0.0
    %706 = vmatpush1.msra.mxu0 0.0
    %707 = vmatprep.subr.mxu0 0.0
    %708 = vmatpush1.msra.mxu0 0.0
    %709 = vmatprep.subr.mxu0 0.0
    %710 = vmatpush1.msra.mxu0 0.0
    %711 = vmatprep.subr.mxu0 0.0
    %712 = vmatpush1.msra.mxu0 0.0
    %713 = vmatprep.subr.mxu0 0.0
    %714 = vmatpush1.msra.mxu0 0.0
    %715 = vmatprep.subr.mxu0 0.0
    %716 = vmatpush1.msra.mxu0 0.0
    %717 = vmatprep.subr.mxu0 0.0
    %718 = vmatpush1.msra.mxu0 0.0
    %719 = vmatprep.subr.mxu0 0.0
    %720 = vmatpush1.msra.mxu0 0.0
    %721 = vmatprep.subr.mxu0 0.0
    %722 = vmatpush1.msra.mxu0 0.0
    %723 = vmatprep.subr.mxu0 0.0
    %724 = vmatpush1.msra.mxu0 0.0
    %725 = vmatprep.mubr.f32.mxu0 0.0
    %726 = vmatmul.mubr.f32.gmra.mrb[0].mxu0 %v659
    %v727 = vpop.f32.mrb[0].mxu0
    %v728 = vadd.f32 0.0, %v727
    %v729 = vpop.f32.mrb[0].mxu0
    %730 = vdwg.mxu0
    %v731 = vadd.f32 %v650, %v728
    %v732 = vld [vmem:[#allocation9 + $0x2] sm:$0x1]
    %v733 = vlaneseq
    %v734 = vshrl.u32 %v733, 7
    %v735 = vsub.s32 0, %v734
    %v736 = vrot.slane %v732, %v735
    %v737 = vadd.f32 %v731, %v736
    %v738 = vld [vmem:[#allocation7] sm:$0x3]
    %v739 = vmul.f32 %v737, 0.5
    %v740 = vtanh.pop %v739
    %v741 = vadd.f32 %v740, 1.0
    %v742 = vmul.f32 %v741, 0.5
    %v743 = vtanh.pop %v737
    %745 = vrot.lane.b32.xlu0 %v738, 32
    %v746 = vpop.permute.xlu0 %745
    %v748 = vmul.f32 %v742, %v746
    %750 = vrot.lane.b32.xlu0 %v743, 64
    %v751 = vpop.permute.xlu0 %750
    %v753 = vmul.f32 %v742, %v751
    %755 = vrot.lane.b32.xlu0 %v753, 32
    %v756 = vpop.permute.xlu0 %755
    %v758 = vadd.f32 %v748, %v756
    %v759 = vtanh.pop %v758
    %761 = vrot.lane.b32.xlu0 %v759, 64
    %v762 = vpop.permute.xlu0 %761
    %v764 = vmul.f32 %v742, %v762
    %766 = vrot.lane.b32.xlu0 %v764, 32
    %v767 = vpop.permute.xlu0 %766
    %vm769 = vcmask 254976
    %770 = vst.msk [vmem:[#allocation11] sm:$0x3] %vm769, %v767
    %772 = vrot.lane.b32.xlu0 %v758, 96
    %v773 = vpop.permute.xlu0 %772
    %775 = vst.msk [vmem:[#allocation13] sm:$0x3] %vm769, %v773
    %v776 = vld [vmem:[%s7 + $0x80] sm:$0xff]
    %v777 = vld [vmem:[%s7 + $0x88] sm:$0xff]
    %v778 = vld [vmem:[%s7 + $0x90] sm:$0xff]
    %v779 = vld [vmem:[%s7 + $0x98] sm:$0xff]
    %s780 = scalar_lea.vmem [#allocation6], 2
    %v781 = vld [vmem:[%s780] sm:$0x3]
    %v782 = vld [vmem:[%s7 + $0xa0] sm:$0xff]
    %v783 = vld [vmem:[%s7 + $0xa8] sm:$0xff]
    %v784 = vld [vmem:[%s7 + $0xb0] sm:$0xff]
    %v785 = vld [vmem:[%s7 + $0xb8] sm:$0xff]
    %v787 = vsel %vm111, %v781, 0
    %789 = vmatprep.subr.mxu0 0.0
    %790 = vmatpush1.msra.mxu0 %v782
    %791 = vmatprep.subr.mxu0 0.0
    %792 = vmatpush1.msra.mxu0 %v783
    %793 = vmatprep.subr.mxu0 0.0
    %794 = vmatpush1.msra.mxu0 %v784
    %795 = vmatprep.subr.mxu0 0.0
    %796 = vmatpush1.msra.mxu0 %v785
    %797 = vmatprep.subr.mxu0 0.0
    %798 = vmatpush1.msra.mxu0 0.0
    %799 = vmatprep.subr.mxu0 0.0
    %800 = vmatpush1.msra.mxu0 0.0
    %801 = vmatprep.subr.mxu0 0.0
    %802 = vmatpush1.msra.mxu0 0.0
    %803 = vmatprep.subr.mxu0 0.0
    %804 = vmatpush1.msra.mxu0 0.0
    %805 = vmatprep.subr.mxu0 0.0
    %806 = vmatpush1.msra.mxu0 0.0
    %807 = vmatprep.subr.mxu0 0.0
    %808 = vmatpush1.msra.mxu0 0.0
    %809 = vmatprep.subr.mxu0 0.0
    %810 = vmatpush1.msra.mxu0 0.0
    %811 = vmatprep.subr.mxu0 0.0
    %812 = vmatpush1.msra.mxu0 0.0
    %813 = vmatprep.subr.mxu0 0.0
    %814 = vmatpush1.msra.mxu0 0.0
    %815 = vmatprep.subr.mxu0 0.0
    %816 = vmatpush1.msra.mxu0 0.0
    %817 = vmatprep.subr.mxu0 0.0
    %818 = vmatpush1.msra.mxu0 0.0
    %819 = vmatprep.subr.mxu0 0.0
    %820 = vmatpush1.msra.mxu0 0.0
    %821 = vmatprep.subr.mxu0 0.0
    %822 = vmatpush1.msra.mxu0 0.0
    %823 = vmatprep.subr.mxu0 0.0
    %824 = vmatpush1.msra.mxu0 0.0
    %825 = vmatprep.subr.mxu0 0.0
    %826 = vmatpush1.msra.mxu0 0.0
    %827 = vmatprep.subr.mxu0 0.0
    %828 = vmatpush1.msra.mxu0 0.0
    %829 = vmatprep.subr.mxu0 0.0
    %830 = vmatpush1.msra.mxu0 0.0
    %831 = vmatprep.subr.mxu0 0.0
    %832 = vmatpush1.msra.mxu0 0.0
    %833 = vmatprep.subr.mxu0 0.0
    %834 = vmatpush1.msra.mxu0 0.0
    %835 = vmatprep.subr.mxu0 0.0
    %836 = vmatpush1.msra.mxu0 0.0
    %837 = vmatprep.subr.mxu0 0.0
    %838 = vmatpush1.msra.mxu0 0.0
    %839 = vmatprep.subr.mxu0 0.0
    %840 = vmatpush1.msra.mxu0 0.0
    %841 = vmatprep.subr.mxu0 0.0
    %842 = vmatpush1.msra.mxu0 0.0
    %843 = vmatprep.subr.mxu0 0.0
    %844 = vmatpush1.msra.mxu0 0.0
    %845 = vmatprep.subr.mxu0 0.0
    %846 = vmatpush1.msra.mxu0 0.0
    %847 = vmatprep.subr.mxu0 0.0
    %848 = vmatpush1.msra.mxu0 0.0
    %849 = vmatprep.subr.mxu0 0.0
    %850 = vmatpush1.msra.mxu0 0.0
    %851 = vmatprep.subr.mxu0 0.0
    %852 = vmatpush1.msra.mxu0 0.0
    %853 = vmatprep.mubr.f32.mxu0 0.0
    %854 = vmatmul.mubr.f32.gmra.mrb[0].mxu0 %v787
    %v855 = vpop.f32.mrb[0].mxu0
    %v856 = vadd.f32 0.0, %v855
    %v857 = vpop.f32.mrb[0].mxu0
    %858 = vdwg.mxu0
    %v859 = vsel %vm111, %v767, 0
    %861 = vmatprep.subr.mxu0 0.0
    %862 = vmatpush1.msra.mxu0 %v776
    %863 = vmatprep.subr.mxu0 0.0
    %864 = vmatpush1.msra.mxu0 %v777
    %865 = vmatprep.subr.mxu0 0.0
    %866 = vmatpush1.msra.mxu0 %v778
    %867 = vmatprep.subr.mxu0 0.0
    %868 = vmatpush1.msra.mxu0 %v779
    %869 = vmatprep.subr.mxu0 0.0
    %870 = vmatpush1.msra.mxu0 0.0
    %871 = vmatprep.subr.mxu0 0.0
    %872 = vmatpush1.msra.mxu0 0.0
    %873 = vmatprep.subr.mxu0 0.0
    %874 = vmatpush1.msra.mxu0 0.0
    %875 = vmatprep.subr.mxu0 0.0
    %876 = vmatpush1.msra.mxu0 0.0
    %877 = vmatprep.subr.mxu0 0.0
    %878 = vmatpush1.msra.mxu0 0.0
    %879 = vmatprep.subr.mxu0 0.0
    %880 = vmatpush1.msra.mxu0 0.0
    %881 = vmatprep.subr.mxu0 0.0
    %882 = vmatpush1.msra.mxu0 0.0
    %883 = vmatprep.subr.mxu0 0.0
    %884 = vmatpush1.msra.mxu0 0.0
    %885 = vmatprep.subr.mxu0 0.0
    %886 = vmatpush1.msra.mxu0 0.0
    %887 = vmatprep.subr.mxu0 0.0
    %888 = vmatpush1.msra.mxu0 0.0
    %889 = vmatprep.subr.mxu0 0.0
    %890 = vmatpush1.msra.mxu0 0.0
    %891 = vmatprep.subr.mxu0 0.0
    %892 = vmatpush1.msra.mxu0 0.0
    %893 = vmatprep.subr.mxu0 0.0
    %894 = vmatpush1.msra.mxu0 0.0
    %895 = vmatprep.subr.mxu0 0.0
    %896 = vmatpush1.msra.mxu0 0.0
    %897 = vmatprep.subr.mxu0 0.0
    %898 = vmatpush1.msra.mxu0 0.0
    %899 = vmatprep.subr.mxu0 0.0
    %900 = vmatpush1.msra.mxu0 0.0
    %901 = vmatprep.subr.mxu0 0.0
    %902 = vmatpush1.msra.mxu0 0.0
    %903 = vmatprep.subr.mxu0 0.0
    %904 = vmatpush1.msra.mxu0 0.0
    %905 = vmatprep.subr.mxu0 0.0
    %906 = vmatpush1.msra.mxu0 0.0
    %907 = vmatprep.subr.mxu0 0.0
    %908 = vmatpush1.msra.mxu0 0.0
    %909 = vmatprep.subr.mxu0 0.0
    %910 = vmatpush1.msra.mxu0 0.0
    %911 = vmatprep.subr.mxu0 0.0
    %912 = vmatpush1.msra.mxu0 0.0
    %913 = vmatprep.subr.mxu0 0.0
    %914 = vmatpush1.msra.mxu0 0.0
    %915 = vmatprep.subr.mxu0 0.0
    %916 = vmatpush1.msra.mxu0 0.0
    %917 = vmatprep.subr.mxu0 0.0
    %918 = vmatpush1.msra.mxu0 0.0
    %919 = vmatprep.subr.mxu0 0.0
    %920 = vmatpush1.msra.mxu0 0.0
    %921 = vmatprep.subr.mxu0 0.0
    %922 = vmatpush1.msra.mxu0 0.0
    %923 = vmatprep.subr.mxu0 0.0
    %924 = vmatpush1.msra.mxu0 0.0
    %925 = vmatprep.mubr.f32.mxu0 0.0
    %926 = vmatmul.mubr.f32.gmra.mrb[0].mxu0 %v859
    %v927 = vpop.f32.mrb[0].mxu0
    %v928 = vadd.f32 %v856, %v927
    %v929 = vpop.f32.mrb[0].mxu0
    %930 = vdwg.mxu0
    %v931 = vld [vmem:[#allocation9 + $0x3] sm:$0x1]
    %v932 = vlaneseq
    %v933 = vshrl.u32 %v932, 7
    %v934 = vsub.s32 0, %v933
    %v935 = vrot.slane %v931, %v934
    %v936 = vadd.f32 %v928, %v935
    %s937 = scalar_lea.vmem [#allocation7], 2
    %v938 = vld [vmem:[%s937] sm:$0x3]
    %v939 = vmul.f32 %v936, 0.5
    %v940 = vtanh.pop %v939
    %v941 = vadd.f32 %v940, 1.0
    %v942 = vmul.f32 %v941, 0.5
    %v943 = vtanh.pop %v936
    %945 = vrot.lane.b32.xlu0 %v938, 32
    %v946 = vpop.permute.xlu0 %945
    %v948 = vmul.f32 %v942, %v946
    %950 = vrot.lane.b32.xlu0 %v943, 64
    %v951 = vpop.permute.xlu0 %950
    %v953 = vmul.f32 %v942, %v951
    %955 = vrot.lane.b32.xlu0 %v953, 32
    %v956 = vpop.permute.xlu0 %955
    %v958 = vadd.f32 %v948, %v956
    %v959 = vtanh.pop %v958
    %961 = vrot.lane.b32.xlu0 %v959, 64
    %v962 = vpop.permute.xlu0 %961
    %v964 = vmul.f32 %v942, %v962
    %966 = vrot.lane.b32.xlu0 %v964, 32
    %v967 = vpop.permute.xlu0 %966
    %s969 = scalar_lea.vmem [#allocation11], 2
    %970 = vst.msk [vmem:[%s969] sm:$0x3] %vm769, %v967
    %972 = vrot.lane.b32.xlu0 %v958, 96
    %v973 = vpop.permute.xlu0 %972
    %s975 = scalar_lea.vmem [#allocation13], 2
    %976 = vst.msk [vmem:[%s975] sm:$0x3] %vm769, %v973
    %v977 = vld [vmem:[%s7 + $0xc0] sm:$0xff]
    %v978 = vld [vmem:[%s7 + $0xc8] sm:$0xff]
    %v979 = vld [vmem:[%s7 + $0xd0] sm:$0xff]
    %v980 = vld [vmem:[%s7 + $0xd8] sm:$0xff]
    %v981 = vld [vmem:[%s105] sm:$0x3]
    %v982 = vld [vmem:[%s7 + $0xe0] sm:$0xff]
    %v983 = vld [vmem:[%s7 + $0xe8] sm:$0xff]
    %v984 = vld [vmem:[%s7 + $0xf0] sm:$0xff]
    %v985 = vld [vmem:[%s7 + $0xf8] sm:$0xff]
    %v987 = vsel %vm111, %v981, 0
    %989 = vmatprep.subr.mxu0 0.0
    %990 = vmatpush1.msra.mxu0 %v982
    %991 = vmatprep.subr.mxu0 0.0
    %992 = vmatpush1.msra.mxu0 %v983
    %993 = vmatprep.subr.mxu0 0.0
    %994 = vmatpush1.msra.mxu0 %v984
    %995 = vmatprep.subr.mxu0 0.0
    %996 = vmatpush1.msra.mxu0 %v985
    %997 = vmatprep.subr.mxu0 0.0
    %998 = vmatpush1.msra.mxu0 0.0
    %999 = vmatprep.subr.mxu0 0.0
    %1000 = vmatpush1.msra.mxu0 0.0
    %1001 = vmatprep.subr.mxu0 0.0
    %1002 = vmatpush1.msra.mxu0 0.0
    %1003 = vmatprep.subr.mxu0 0.0
    %1004 = vmatpush1.msra.mxu0 0.0
    %1005 = vmatprep.subr.mxu0 0.0
    %1006 = vmatpush1.msra.mxu0 0.0
    %1007 = vmatprep.subr.mxu0 0.0
    %1008 = vmatpush1.msra.mxu0 0.0
    %1009 = vmatprep.subr.mxu0 0.0
    %1010 = vmatpush1.msra.mxu0 0.0
    %1011 = vmatprep.subr.mxu0 0.0
    %1012 = vmatpush1.msra.mxu0 0.0
    %1013 = vmatprep.subr.mxu0 0.0
    %1014 = vmatpush1.msra.mxu0 0.0
    %1015 = vmatprep.subr.mxu0 0.0
    %1016 = vmatpush1.msra.mxu0 0.0
    %1017 = vmatprep.subr.mxu0 0.0
    %1018 = vmatpush1.msra.mxu0 0.0
    %1019 = vmatprep.subr.mxu0 0.0
    %1020 = vmatpush1.msra.mxu0 0.0
    %1021 = vmatprep.subr.mxu0 0.0
    %1022 = vmatpush1.msra.mxu0 0.0
    %1023 = vmatprep.subr.mxu0 0.0
    %1024 = vmatpush1.msra.mxu0 0.0
    %1025 = vmatprep.subr.mxu0 0.0
    %1026 = vmatpush1.msra.mxu0 0.0
    %1027 = vmatprep.subr.mxu0 0.0
    %1028 = vmatpush1.msra.mxu0 0.0
    %1029 = vmatprep.subr.mxu0 0.0
    %1030 = vmatpush1.msra.mxu0 0.0
    %1031 = vmatprep.subr.mxu0 0.0
    %1032 = vmatpush1.msra.mxu0 0.0
    %1033 = vmatprep.subr.mxu0 0.0
    %1034 = vmatpush1.msra.mxu0 0.0
    %1035 = vmatprep.subr.mxu0 0.0
    %1036 = vmatpush1.msra.mxu0 0.0
    %1037 = vmatprep.subr.mxu0 0.0
    %1038 = vmatpush1.msra.mxu0 0.0
    %1039 = vmatprep.subr.mxu0 0.0
    %1040 = vmatpush1.msra.mxu0 0.0
    %1041 = vmatprep.subr.mxu0 0.0
    %1042 = vmatpush1.msra.mxu0 0.0
    %1043 = vmatprep.subr.mxu0 0.0
    %1044 = vmatpush1.msra.mxu0 0.0
    %1045 = vmatprep.subr.mxu0 0.0
    %1046 = vmatpush1.msra.mxu0 0.0
    %1047 = vmatprep.subr.mxu0 0.0
    %1048 = vmatpush1.msra.mxu0 0.0
    %1049 = vmatprep.subr.mxu0 0.0
    %1050 = vmatpush1.msra.mxu0 0.0
    %1051 = vmatprep.subr.mxu0 0.0
    %1052 = vmatpush1.msra.mxu0 0.0
    %1053 = vmatprep.mubr.f32.mxu0 0.0
    %1054 = vmatmul.mubr.f32.gmra.mrb[0].mxu0 %v987
    %v1055 = vpop.f32.mrb[0].mxu0
    %v1056 = vadd.f32 0.0, %v1055
    %v1057 = vpop.f32.mrb[0].mxu0
    %1058 = vdwg.mxu0
    %v1059 = vsel %vm111, %v967, 0
    %1061 = vmatprep.subr.mxu0 0.0
    %1062 = vmatpush1.msra.mxu0 %v977
    %1063 = vmatprep.subr.mxu0 0.0
    %1064 = vmatpush1.msra.mxu0 %v978
    %1065 = vmatprep.subr.mxu0 0.0
    %1066 = vmatpush1.msra.mxu0 %v979
    %1067 = vmatprep.subr.mxu0 0.0
    %1068 = vmatpush1.msra.mxu0 %v980
    %1069 = vmatprep.subr.mxu0 0.0
    %1070 = vmatpush1.msra.mxu0 0.0
    %1071 = vmatprep.subr.mxu0 0.0
    %1072 = vmatpush1.msra.mxu0 0.0
    %1073 = vmatprep.subr.mxu0 0.0
    %1074 = vmatpush1.msra.mxu0 0.0
    %1075 = vmatprep.subr.mxu0 0.0
    %1076 = vmatpush1.msra.mxu0 0.0
    %1077 = vmatprep.subr.mxu0 0.0
    %1078 = vmatpush1.msra.mxu0 0.0
    %1079 = vmatprep.subr.mxu0 0.0
    %1080 = vmatpush1.msra.mxu0 0.0
    %1081 = vmatprep.subr.mxu0 0.0
    %1082 = vmatpush1.msra.mxu0 0.0
    %1083 = vmatprep.subr.mxu0 0.0
    %1084 = vmatpush1.msra.mxu0 0.0
    %1085 = vmatprep.subr.mxu0 0.0
    %1086 = vmatpush1.msra.mxu0 0.0
    %1087 = vmatprep.subr.mxu0 0.0
    %1088 = vmatpush1.msra.mxu0 0.0
    %1089 = vmatprep.subr.mxu0 0.0
    %1090 = vmatpush1.msra.mxu0 0.0
    %1091 = vmatprep.subr.mxu0 0.0
    %1092 = vmatpush1.msra.mxu0 0.0
    %1093 = vmatprep.subr.mxu0 0.0
    %1094 = vmatpush1.msra.mxu0 0.0
    %1095 = vmatprep.subr.mxu0 0.0
    %1096 = vmatpush1.msra.mxu0 0.0
    %1097 = vmatprep.subr.mxu0 0.0
    %1098 = vmatpush1.msra.mxu0 0.0
    %1099 = vmatprep.subr.mxu0 0.0
    %1100 = vmatpush1.msra.mxu0 0.0
    %1101 = vmatprep.subr.mxu0 0.0
    %1102 = vmatpush1.msra.mxu0 0.0
    %1103 = vmatprep.subr.mxu0 0.0
    %1104 = vmatpush1.msra.mxu0 0.0
    %1105 = vmatprep.subr.mxu0 0.0
    %1106 = vmatpush1.msra.mxu0 0.0
    %1107 = vmatprep.subr.mxu0 0.0
    %1108 = vmatpush1.msra.mxu0 0.0
    %1109 = vmatprep.subr.mxu0 0.0
    %1110 = vmatpush1.msra.mxu0 0.0
    %1111 = vmatprep.subr.mxu0 0.0
    %1112 = vmatpush1.msra.mxu0 0.0
    %1113 = vmatprep.subr.mxu0 0.0
    %1114 = vmatpush1.msra.mxu0 0.0
    %1115 = vmatprep.subr.mxu0 0.0
    %1116 = vmatpush1.msra.mxu0 0.0
    %1117 = vmatprep.subr.mxu0 0.0
    %1118 = vmatpush1.msra.mxu0 0.0
    %1119 = vmatprep.subr.mxu0 0.0
    %1120 = vmatpush1.msra.mxu0 0.0
    %1121 = vmatprep.subr.mxu0 0.0
    %1122 = vmatpush1.msra.mxu0 0.0
    %1123 = vmatprep.subr.mxu0 0.0
    %1124 = vmatpush1.msra.mxu0 0.0
    %1125 = vmatprep.mubr.f32.mxu0 0.0
    %1126 = vmatmul.mubr.f32.gmra.mrb[0].mxu0 %v1059
    %v1127 = vpop.f32.mrb[0].mxu0
    %v1128 = vadd.f32 %v1056, %v1127
    %v1129 = vpop.f32.mrb[0].mxu0
    %1130 = vdwg.mxu0
    %v1131 = vld [vmem:[#allocation9 + $0x4] sm:$0x1]
    %v1132 = vlaneseq
    %v1133 = vshrl.u32 %v1132, 7
    %v1134 = vsub.s32 0, %v1133
    %v1135 = vrot.slane %v1131, %v1134
    %v1136 = vadd.f32 %v1128, %v1135
    %s1137 = scalar_lea.vmem [#allocation7], 4
    %v1138 = vld [vmem:[%s1137] sm:$0x3]
    %v1139 = vmul.f32 %v1136, 0.5
    %v1140 = vtanh.pop %v1139
    %v1141 = vadd.f32 %v1140, 1.0
    %v1142 = vmul.f32 %v1141, 0.5
    %v1143 = vtanh.pop %v1136
    %1145 = vrot.lane.b32.xlu0 %v1138, 32
    %v1146 = vpop.permute.xlu0 %1145
    %v1148 = vmul.f32 %v1142, %v1146
    %1150 = vrot.lane.b32.xlu0 %v1143, 64
    %v1151 = vpop.permute.xlu0 %1150
    %v1153 = vmul.f32 %v1142, %v1151
    %1155 = vrot.lane.b32.xlu0 %v1153, 32
    %v1156 = vpop.permute.xlu0 %1155
    %v1158 = vadd.f32 %v1148, %v1156
    %v1159 = vtanh.pop %v1158
    %1161 = vrot.lane.b32.xlu0 %v1159, 64
    %v1162 = vpop.permute.xlu0 %1161
    %v1164 = vmul.f32 %v1142, %v1162
    %1166 = vrot.lane.b32.xlu0 %v1164, 32
    %v1167 = vpop.permute.xlu0 %1166
    %s1169 = scalar_lea.vmem [#allocation11], 4
    %1170 = vst.msk [vmem:[%s1169] sm:$0x3] %vm769, %v1167
    %1172 = vrot.lane.b32.xlu0 %v1158, 96
    %v1173 = vpop.permute.xlu0 %1172
    %s1175 = scalar_lea.vmem [#allocation13], 4
    %1176 = vst.msk [vmem:[%s1175] sm:$0x3] %vm769, %v1173
    %v1177 = vld [vmem:[%s8] sm:$0xff]
    %v1178 = vld [vmem:[%s8 + $0x8] sm:$0xff]
    %v1179 = vld [vmem:[%s8 + $0x10] sm:$0xff]
    %v1180 = vld [vmem:[%s8 + $0x18] sm:$0xff]
    %v1181 = vld [vmem:[#allocation9 + $0x5] sm:$0x1]
    %v1182 = vlaneseq
    %v1183 = vshrl.u32 %v1182, 7
    %v1184 = vsub.s32 0, %v1183
    %v1185 = vrot.slane %v1181, %v1184
    %v1186 = vsel %vm111, %v1167, 0
    %1188 = vmatprep.subr.mxu0 0.0
    %1189 = vmatpush1.msra.mxu0 %v1177
    %1190 = vmatprep.subr.mxu0 0.0
    %1191 = vmatpush1.msra.mxu0 %v1178
    %1192 = vmatprep.subr.mxu0 0.0
    %1193 = vmatpush1.msra.mxu0 %v1179
    %1194 = vmatprep.subr.mxu0 0.0
    %1195 = vmatpush1.msra.mxu0 %v1180
    %1196 = vmatprep.subr.mxu0 0.0
    %1197 = vmatpush1.msra.mxu0 0.0
    %1198 = vmatprep.subr.mxu0 0.0
    %1199 = vmatpush1.msra.mxu0 0.0
    %1200 = vmatprep.subr.mxu0 0.0
    %1201 = vmatpush1.msra.mxu0 0.0
    %1202 = vmatprep.subr.mxu0 0.0
    %1203 = vmatpush1.msra.mxu0 0.0
    %1204 = vmatprep.subr.mxu0 0.0
    %1205 = vmatpush1.msra.mxu0 0.0
    %1206 = vmatprep.subr.mxu0 0.0
    %1207 = vmatpush1.msra.mxu0 0.0
    %1208 = vmatprep.subr.mxu0 0.0
    %1209 = vmatpush1.msra.mxu0 0.0
    %1210 = vmatprep.subr.mxu0 0.0
    %1211 = vmatpush1.msra.mxu0 0.0
    %1212 = vmatprep.subr.mxu0 0.0
    %1213 = vmatpush1.msra.mxu0 0.0
    %1214 = vmatprep.subr.mxu0 0.0
    %1215 = vmatpush1.msra.mxu0 0.0
    %1216 = vmatprep.subr.mxu0 0.0
    %1217 = vmatpush1.msra.mxu0 0.0
    %1218 = vmatprep.subr.mxu0 0.0
    %1219 = vmatpush1.msra.mxu0 0.0
    %1220 = vmatprep.subr.mxu0 0.0
    %1221 = vmatpush1.msra.mxu0 0.0
    %1222 = vmatprep.subr.mxu0 0.0
    %1223 = vmatpush1.msra.mxu0 0.0
    %1224 = vmatprep.subr.mxu0 0.0
    %1225 = vmatpush1.msra.mxu0 0.0
    %1226 = vmatprep.subr.mxu0 0.0
    %1227 = vmatpush1.msra.mxu0 0.0
    %1228 = vmatprep.subr.mxu0 0.0
    %1229 = vmatpush1.msra.mxu0 0.0
    %1230 = vmatprep.subr.mxu0 0.0
    %1231 = vmatpush1.msra.mxu0 0.0
    %1232 = vmatprep.subr.mxu0 0.0
    %1233 = vmatpush1.msra.mxu0 0.0
    %1234 = vmatprep.subr.mxu0 0.0
    %1235 = vmatpush1.msra.mxu0 0.0
    %1236 = vmatprep.subr.mxu0 0.0
    %1237 = vmatpush1.msra.mxu0 0.0
    %1238 = vmatprep.subr.mxu0 0.0
    %1239 = vmatpush1.msra.mxu0 0.0
    %1240 = vmatprep.subr.mxu0 0.0
    %1241 = vmatpush1.msra.mxu0 0.0
    %1242 = vmatprep.subr.mxu0 0.0
    %1243 = vmatpush1.msra.mxu0 0.0
    %1244 = vmatprep.subr.mxu0 0.0
    %1245 = vmatpush1.msra.mxu0 0.0
    %1246 = vmatprep.subr.mxu0 0.0
    %1247 = vmatpush1.msra.mxu0 0.0
    %1248 = vmatprep.subr.mxu0 0.0
    %1249 = vmatpush1.msra.mxu0 0.0
    %1250 = vmatprep.subr.mxu0 0.0
    %1251 = vmatpush1.msra.mxu0 0.0
    %1252 = vmatprep.mubr.f32.mxu0 0.0
    %1253 = vmatmul.mubr.f32.gmra.mrb[0].mxu0 %v1186
    %v1254 = vpop.f32.mrb[0].mxu0
    %v1255 = vadd.f32 %v1185, %v1254
    %v1256 = vpop.f32.mrb[0].mxu0
    %1257 = vdwg.mxu0
    %vm1258 = vcmask 517120
    %1259 = vst.msk [vmem:[#allocation10] sm:$0x3] %vm1258, %v1255
    // Predicated region
    $region58: #{decoder_forward.1} parent=1 // pred_check
      _
    $region59: #{decoder_forward.1} parent=1 // pred_check_branch
      %1261 = sbr.rel (0) target = $region61
    $region60: #{decoder_forward.1} parent=1 // pred_region
      %s1263 = ssub.s32 32, 32
      %1264 = vsyncadd [#allocation4], %s1263
      %s1266 = sshll.u32 [#allocation10], 4
      %s1267 = int_to_ptr.vmem [resolvable:$true] %s1266
      %1269 = dma.vmem_to_hbm [thread:$0]  %s1267, 32, %s10, [#allocation4]
    $region61: #{decoder_forward.1} parent=1 // pred_fallthru
      _
    // Predicated region
    $region62: #{decoder_forward.1} parent=1 // pred_check
      _
    $region63: #{decoder_forward.1} parent=1 // pred_check_branch
      %1271 = sbr.rel (0) target = $region65
    $region64: #{decoder_forward.1} parent=1 // pred_region
      %s1273 = ssub.s32 96, 96
      %1274 = vsyncadd [#allocation12], %s1273
      %s1275 = sshll.u32 [#allocation11], 4
      %s1276 = int_to_ptr.vmem [resolvable:$true] %s1275
      %1281 = dma.vmem_to_hbm [thread:$0]  %s1276, 96, %s11, [#allocation12], 32, 32, 2
    $region65: #{decoder_forward.1} parent=1 // pred_fallthru
      _
    // Predicated region
    $region66: #{decoder_forward.1} parent=1 // pred_check
      _
    $region67: #{decoder_forward.1} parent=1 // pred_check_branch
      %1283 = sbr.rel (0) target = $region69
    $region68: #{decoder_forward.1} parent=1 // pred_region
      %s1285 = ssub.s32 96, 96
      %1286 = vsyncadd [#allocation12], %s1285
      %s1287 = sshll.u32 [#allocation13], 4
      %s1288 = int_to_ptr.vmem [resolvable:$true] %s1287
      %1293 = dma.vmem_to_hbm [thread:$0]  %s1288, 96, %s12, [#allocation12], 32, 32, 2
    $region69: #{decoder_forward.1} parent=1 // pred_fallthru
      _
    // Predicated region
    $region70: #{decoder_forward.1} parent=1 // pred_check
      _
    $region71: #{decoder_forward.1} parent=1 // pred_check_branch
      %1295 = sbr.rel (0) target = $region73
    $region72: #{decoder_forward.1} parent=1 // pred_region
      %1296 = dma.done [#allocation4], 32
    $region73: #{decoder_forward.1} parent=1 // pred_fallthru
      _
    // Predicated region
    $region74: #{decoder_forward.1} parent=1 // pred_check
      _
    $region75: #{decoder_forward.1} parent=1 // pred_check_branch
      %1298 = sbr.rel (0) target = $region77
    $region76: #{decoder_forward.1} parent=1 // pred_region
      %1299 = dma.done [#allocation12], 96
    $region77: #{decoder_forward.1} parent=1 // pred_fallthru
      _
    // Predicated region
    $region78: #{decoder_forward.1} parent=1 // pred_check
      _
    $region79: #{decoder_forward.1} parent=1 // pred_check_branch
      %1301 = sbr.rel (0) target = $region81
    $region80: #{decoder_forward.1} parent=1 // pred_region
      %1302 = dma.done [#allocation12], 96
    $region81: #{decoder_forward.1} parent=1 // pred_fallthru
      _
    %1303 = vsyncpa [#allocation3], 1
    %1304 = vsyncpa [#allocation8], 1
    %1305 = vsyncpa [#allocation4], 1
    %1306 = vsyncpa [#allocation12], 1
    %1307 = vsyncpa [#allocation5], 1

</llo_original>
